<compile_context>
chip_gen: v7x
topology: tpu7x:2x2x1
jax: 0.10.0
libtpu: 0.0.40
codegen_flags: <defaults>
</compile_context>

<pallas_src>
import jax
import jax.numpy as jnp
from jax.experimental import pallas as pl
from jax.experimental.pallas import tpu as pltpu

# ----------------------------- configuration ------------------------------
B = 2                 # batch
MEM_SIZE = 16         # memory_size
MEM_WIDTH = 32        # memory_width
NUM_HEADS = 4         # num_heads
CONTROL_WIDTH = 64    # control_width  (head width = 16, 'project' mode)
DATA_WIDTH = 48       # data_width     (head width = 12)
SHIFT_WIDTH = 3       # shift_kernel_width (symmetric shifts -1, 0, +1)
CTRL_HEAD = CONTROL_WIDTH // NUM_HEADS
DATA_HEAD = DATA_WIDTH // NUM_HEADS
EPS = 1e-8

# fused-projection column layout (category-major, head-major inside category)
_KEY_OFF = 0
_ER_OFF = NUM_HEADS * MEM_WIDTH                       # 128
_BGG_OFF = 2 * NUM_HEADS * MEM_WIDTH                  # 256
_SH_OFF = _BGG_OFF + 3 * NUM_HEADS                    # 268
_WF_OFF = _SH_OFF + SHIFT_WIDTH * NUM_HEADS           # 280
_PROJ_COLS = _WF_OFF + NUM_HEADS * MEM_WIDTH          # 408


# ------------------------- shared math helpers ------------------------------
def _sigmoid(x):
    return 1.0 / (1.0 + jnp.exp(-x))


def _softplus(x):
    # numerically stable: max(x,0) + log(1 + exp(-|x|)); never overflows.
    return jnp.maximum(x, 0.0) + jnp.log(1.0 + jnp.exp(-jnp.abs(x)))


def _softmax_last(x, recip=None):
    m = jnp.max(x, axis=-1, keepdims=True)
    e = jnp.exp(x - m)
    s = jnp.sum(e, axis=-1, keepdims=True)
    if recip is not None:
        return e * recip(s)
    return e / s


def _roll_last(x, off, n):
    """jnp.roll(x, off, axis=-1) built from static slices (kernel-safe)."""
    off = off % n
    if off == 0:
        return x
    return jnp.concatenate([x[..., n - off:], x[..., :n - off]], axis=-1)


# ------------------------------ Pallas kernel ------------------------------
def writer_kernel(xin_ref, mem_ref, wprev_ref, wf_ref, bf_ref,
                  wout_ref, memout_ref):
    recip = lambda d: pl.reciprocal(d, approx=True)   # EUP slot, nearly free

    xin = xin_ref[...]          # (B, CONTROL_WIDTH + DATA_WIDTH)
    mem = mem_ref[...]          # (B, N, W)
    wprev = wprev_ref[...]      # (B, H, N)

    # one fused projection replaces MakeHead + 6 per-head Linears (x4 heads)
    proj = jnp.dot(xin, wf_ref[...],
                   preferred_element_type=jnp.float32) + bf_ref[...]   # (B, 408)

    def split_heads(start, width):
        # head-major (B, H*width) slab of `proj` -> (B, H, width)
        return jnp.stack(
            [proj[:, start + h * width: start + (h + 1) * width]
             for h in range(NUM_HEADS)], axis=1)

    key = split_heads(_KEY_OFF, MEM_WIDTH)                   # (B, H, W)
    erase = _sigmoid(split_heads(_ER_OFF, MEM_WIDTH))        # (B, H, W)
    bgg = split_heads(_BGG_OFF, 3)                           # (B, H, 3)
    shift = _softmax_last(split_heads(_SH_OFF, SHIFT_WIDTH), recip)   # (B, H, S)
    feat = split_heads(_WF_OFF, MEM_WIDTH)                   # (B, H, W)

    beta = _softplus(bgg[..., 0:1])                          # (B, H, 1)
    gate = _sigmoid(bgg[..., 1:2])
    gamma = 1.0 + _softplus(bgg[..., 2:3])

    # ---- NTM addressing, all heads batched ----
    mem_norm = jnp.sqrt(jnp.sum(mem * mem, axis=-1) + EPS)   # (B, N)
    dotp = jnp.einsum('bhw,bnw->bhn', key, mem,
                      preferred_element_type=jnp.float32)    # (B, H, N)
    key_norm = jnp.sqrt(jnp.sum(key * key, axis=-1, keepdims=True) + EPS)
    cos = dotp * recip(key_norm * mem_norm[:, None, :] + EPS)

    wc = _softmax_last(beta * cos, recip)                    # content weights
    wg = gate * wc + (1.0 - gate) * wprev                    # gate interpolation

    half = SHIFT_WIDTH // 2
    shifted = jnp.zeros_like(wg)
    for j in range(SHIFT_WIDTH):                             # circular shift conv
        shifted = shifted + shift[..., j:j + 1] * _roll_last(wg, j - half, MEM_SIZE)

    pw = jnp.exp(gamma * jnp.log(shifted + 1e-12))           # gamma sharpening
    w_new = pw * recip(jnp.sum(pw, axis=-1, keepdims=True))  # (B, H, N)

    # ---- memory update (mirrors torch broadcasting + prod/sum over heads) ----
    one_minus = 1.0 - erase[:, :, None, :] * w_new[:, :, :, None]   # (B,H,N,W)
    adds = feat[:, :, None, :] * w_new[:, :, :, None]                # (B,H,N,W)
    retained = mem * one_minus[:, 0]
    added = adds[:, 0]
    for h in range(1, NUM_HEADS):
        retained = retained * (mem * one_minus[:, h])
        added = added + adds[:, h]

    wout_ref[...] = w_new                         # single store, no per-head loop
    memout_ref[...] = retained + added


# ------------------- offline fusion of the linear chain --------------------
def fuse_params(params):
    """Compose MakeHead + per-head Linears into one block-diagonal matrix."""
    w_ch, b_ch = params["w_ch"], params["b_ch"]
    w_dh, b_dh = params["w_dh"], params["b_dh"]

    def compose_ctrl(w_head, b_head):
        ws, bs = [], []
        for h in range(NUM_HEADS):
            wc = w_ch[:, h * CTRL_HEAD:(h + 1) * CTRL_HEAD]   # (CW, hc)
            bc = b_ch[:, h * CTRL_HEAD:(h + 1) * CTRL_HEAD]   # (1, hc)
            ws.append(wc @ w_head[h])
            bs.append(bc @ w_head[h] + b_head[h:h + 1, :])
        return jnp.concatenate(ws, axis=1), jnp.concatenate(bs, axis=1)

    w_key_f, b_key_f = compose_ctrl(params["w_key"], params["b_key"])
    w_er_f, b_er_f = compose_ctrl(params["w_er"], params["b_er"])
    w_bgg_f, b_bgg_f = compose_ctrl(params["w_bgg"], params["b_bgg"])
    w_sh_f, b_sh_f = compose_ctrl(params["w_shift"], params["b_shift"])

    ws, bs = [], []
    for h in range(NUM_HEADS):
        wd = w_dh[:, h * DATA_HEAD:(h + 1) * DATA_HEAD]
        bd = b_dh[:, h * DATA_HEAD:(h + 1) * DATA_HEAD]
        ws.append(wd @ params["w_wf"][h])
        bs.append(bd @ params["w_wf"][h] + params["b_wf"][h:h + 1, :])
    w_wf_f = jnp.concatenate(ws, axis=1)
    b_wf_f = jnp.concatenate(bs, axis=1)

    ctrl_block = jnp.concatenate([w_key_f, w_er_f, w_bgg_f, w_sh_f], axis=1)
    top = jnp.concatenate(
        [ctrl_block, jnp.zeros((CONTROL_WIDTH, NUM_HEADS * MEM_WIDTH), jnp.float32)],
        axis=1)
    bot = jnp.concatenate(
        [jnp.zeros((DATA_WIDTH, ctrl_block.shape[1]), jnp.float32), w_wf_f],
        axis=1)
    w_fused = jnp.concatenate([top, bot], axis=0)             # (112, 408)
    b_fused = jnp.concatenate(
        [b_key_f, b_er_f, b_bgg_f, b_sh_f, b_wf_f], axis=1)   # (1, 408)
    assert w_fused.shape == (CONTROL_WIDTH + DATA_WIDTH, _PROJ_COLS)
    return w_fused, b_fused


# --------------------------------- wrapper ----------------------------------
@jax.jit
def writer_forward(control_state, data, memory, prior_weights, params):
    """Returns (updated write weights (B,H,N), updated memory (B,N,W))."""
    w_fused, b_fused = fuse_params(params)
    xin = jnp.concatenate([control_state, data], axis=-1)     # (B, 112)

    vmem = lambda: pl.BlockSpec(memory_space=pltpu.MemorySpace.VMEM)
    out_shape = (jax.ShapeDtypeStruct((B, NUM_HEADS, MEM_SIZE), jnp.float32),
                 jax.ShapeDtypeStruct((B, MEM_SIZE, MEM_WIDTH), jnp.float32))
    # everything is tiny -> single program, whole arrays resident in VMEM
    return pl.pallas_call(
        writer_kernel,
        out_shape=out_shape,
        in_specs=[vmem() for _ in range(5)],
        out_specs=(vmem(), vmem()),
    )(xin, memory, prior_weights, w_fused, b_fused)


# ----------------------- deterministic parameter init ----------------------
def init_params(key):
    def uni(k, shape, fan_in):
        bound = 1.0 / float(fan_in) ** 0.5
        return jax.random.uniform(k, shape, jnp.float32, -bound, bound)

    ks = jax.random.split(key, 14)
    return {
        "w_ch":    uni(ks[0],  (CONTROL_WIDTH, NUM_HEADS * CTRL_HEAD), CONTROL_WIDTH),
        "b_ch":    uni(ks[1],  (1, NUM_HEADS * CTRL_HEAD), CONTROL_WIDTH),
        "w_dh":    uni(ks[2],  (DATA_WIDTH, NUM_HEADS * DATA_HEAD), DATA_WIDTH),
        "b_dh":    uni(ks[3],  (1, NUM_HEADS * DATA_HEAD), DATA_WIDTH),
        "w_key":   uni(ks[4],  (NUM_HEADS, CTRL_HEAD, MEM_WIDTH), CTRL_HEAD),
        "b_key":   uni(ks[5],  (NUM_HEADS, MEM_WIDTH), CTRL_HEAD),
        "w_bgg":   uni(ks[6],  (NUM_HEADS, CTRL_HEAD, 3), CTRL_HEAD),   # beta/gate/gamma
        "b_bgg":   uni(ks[7],  (NUM_HEADS, 3), CTRL_HEAD),
        "w_shift": uni(ks[8],  (NUM_HEADS, CTRL_HEAD, SHIFT_WIDTH), CTRL_HEAD),
        "b_shift": uni(ks[9],  (NUM_HEADS, SHIFT_WIDTH), CTRL_HEAD),
        "w_er":    uni(ks[10], (NUM_HEADS, CTRL_HEAD, MEM_WIDTH), CTRL_HEAD),
        "b_er":    uni(ks[11], (NUM_HEADS, MEM_WIDTH), CTRL_HEAD),
        "w_wf":    uni(ks[12], (NUM_HEADS, DATA_HEAD, MEM_WIDTH), DATA_HEAD),
        "b_wf":    uni(ks[13], (NUM_HEADS, MEM_WIDTH), DATA_HEAD),
    }


# --------------------- pure-JAX reference (unfused path) --------------------
def writer_reference(ctrl, dat, mem, wprev, p):
    n_batch, n_mem, m_width = mem.shape
    n_heads = wprev.shape[1]
    hc, hd = CTRL_HEAD, DATA_HEAD

    ch_all = ctrl @ p["w_ch"] + p["b_ch"]
    dh_all = dat @ p["w_dh"] + p["b_dh"]
    mem_norm = jnp.sqrt(jnp.sum(mem * mem, axis=-1) + EPS)

    per_head = []
    retained = None
    added = jnp.zeros((n_batch, n_mem, m_width), jnp.float32)
    half = SHIFT_WIDTH // 2
    for h in range(n_heads):
        ch_h = ch_all[:, h * hc:(h + 1) * hc]
        dh_h = dh_all[:, h * hd:(h + 1) * hd]
        key = ch_h @ p["w_key"][h] + p["b_key"][h:h + 1]
        bgg = ch_h @ p["w_bgg"][h] + p["b_bgg"][h:h + 1]
        beta = _softplus(bgg[:, 0:1])
        gate = _sigmoid(bgg[:, 1:2])
        gamma = 1.0 + _softplus(bgg[:, 2:3])
        shift = _softmax_last(ch_h @ p["w_shift"][h] + p["b_shift"][h:h + 1])
        erase = _sigmoid(ch_h @ p["w_er"][h] + p["b_er"][h:h + 1])
        feat = dh_h @ p["w_wf"][h] + p["b_wf"][h:h + 1]

        dotp = jnp.sum(key[:, None, :] * mem, axis=-1)
        key_norm = jnp.sqrt(jnp.sum(key * key, -1, keepdims=True) + EPS)
        cos = dotp / (key_norm * mem_norm + EPS)
        wc = _softmax_last(beta * cos)
        wg = gate * wc + (1.0 - gate) * wprev[:, h, :]
        shifted = jnp.zeros_like(wg)
        for j in range(SHIFT_WIDTH):
            shifted = shifted + shift[:, j:j + 1] * _roll_last(wg, j - half, n_mem)
        pw = jnp.exp(gamma * jnp.log(shifted + 1e-12))
        w_new = pw / jnp.sum(pw, -1, keepdims=True)

        term = mem * (1.0 - erase[:, None, :] * w_new[:, :, None])
        retained = term if retained is None else retained * term
        added = added + feat[:, None, :] * w_new[:, :, None]
        per_head.append(w_new)
    return jnp.stack(per_head, axis=1), retained + added


# ----------------------------------- main -----------------------------------
if __name__ == "__main__":
    root = jax.random.PRNGKey(0)
    k_in, k_p = jax.random.split(root)
    k1, k2, k3, k4 = jax.random.split(k_in, 4)

    control_state = jax.random.normal(k1, (B, CONTROL_WIDTH), jnp.float32)
    data = jax.random.normal(k2, (B, DATA_WIDTH), jnp.float32)
    memory = 0.5 * jax.random.normal(k3, (B, MEM_SIZE, MEM_WIDTH), jnp.float32)
    prior_weights = jax.nn.softmax(
        jax.random.normal(k4, (B, NUM_HEADS, MEM_SIZE), jnp.float32), axis=-1)
    params = init_params(k_p)

    new_weights, new_memory = writer_forward(
        control_state, data, memory, prior_weights, params)
    jax.block_until_ready((new_weights, new_memory))

    ref_w, ref_m = writer_reference(
        control_state, data, memory, prior_weights, params)
    assert new_weights.shape == (B, NUM_HEADS, MEM_SIZE)
    assert new_memory.shape == (B, MEM_SIZE, MEM_WIDTH)
    assert jnp.allclose(new_weights, ref_w, atol=5e-3, rtol=5e-2), "weights mismatch"
    assert jnp.allclose(new_memory, ref_m, atol=5e-3, rtol=5e-2), "memory mismatch"

    print("KERNEL_OK")
</pallas_src>

<mosaic_0001>
module attributes {stable_mosaic.version = 11 : i64} {
  func.func @writer_kernel(%arg0: memref<2x112xf32, #tpu.memory_space<vmem>>, %arg1: memref<2x16x32xf32, #tpu.memory_space<vmem>>, %arg2: memref<2x4x16xf32, #tpu.memory_space<vmem>>, %arg3: memref<112x408xf32, #tpu.memory_space<vmem>>, %arg4: memref<1x408xf32, #tpu.memory_space<vmem>>, %arg5: memref<2x4x16xf32, #tpu.memory_space<vmem>>, %arg6: memref<2x16x32xf32, #tpu.memory_space<vmem>>) attributes {dimension_semantics = [], scalar_prefetch = 0 : i64, scratch_operands = 0 : i64, tpu.core_type = #tpu.core_type<tc>} {
    %c0 = arith.constant 0 : index
    %c0_0 = arith.constant 0 : index
    %0 = vector.load %arg0[%c0, %c0_0] : memref<2x112xf32, #tpu.memory_space<vmem>>, vector<2x112xf32>
    %c0_1 = arith.constant 0 : index
    %c0_2 = arith.constant 0 : index
    %c0_3 = arith.constant 0 : index
    %1 = vector.load %arg1[%c0_1, %c0_2, %c0_3] : memref<2x16x32xf32, #tpu.memory_space<vmem>>, vector<2x16x32xf32>
    %c0_4 = arith.constant 0 : index
    %c0_5 = arith.constant 0 : index
    %c0_6 = arith.constant 0 : index
    %2 = vector.load %arg2[%c0_4, %c0_5, %c0_6] : memref<2x4x16xf32, #tpu.memory_space<vmem>>, vector<2x4x16xf32>
    %c0_7 = arith.constant 0 : index
    %c0_8 = arith.constant 0 : index
    %3 = vector.load %arg3[%c0_7, %c0_8] : memref<112x408xf32, #tpu.memory_space<vmem>>, vector<112x408xf32>
    %cst = arith.constant dense<0.000000e+00> : vector<2x408xf32>
    %4 = tpu.matmul %0, %3, %cst {dimension_numbers = #tpu.dot_dimension_numbers<[1], [0], [0], [1], [0, 0, 1, 1], [], []>} : vector<2x112xf32>, vector<112x408xf32>, vector<2x408xf32> -> vector<2x408xf32>
    %c0_9 = arith.constant 0 : index
    %c0_10 = arith.constant 0 : index
    %5 = vector.load %arg4[%c0_9, %c0_10] : memref<1x408xf32, #tpu.memory_space<vmem>>, vector<1x408xf32>
    %6 = vector.broadcast %5 : vector<1x408xf32> to vector<2x408xf32>
    %7 = arith.addf %4, %6 : vector<2x408xf32>
    %8 = vector.extract_strided_slice %7 {offsets = [0, 0], sizes = [2, 32], strides = [1, 1]} : vector<2x408xf32> to vector<2x32xf32>
    %9 = vector.extract_strided_slice %7 {offsets = [0, 32], sizes = [2, 32], strides = [1, 1]} : vector<2x408xf32> to vector<2x32xf32>
    %10 = vector.extract_strided_slice %7 {offsets = [0, 64], sizes = [2, 32], strides = [1, 1]} : vector<2x408xf32> to vector<2x32xf32>
    %11 = vector.extract_strided_slice %7 {offsets = [0, 96], sizes = [2, 32], strides = [1, 1]} : vector<2x408xf32> to vector<2x32xf32>
    %12 = vector.shape_cast %8 : vector<2x32xf32> to vector<2x1x32xf32>
    %13 = vector.shape_cast %9 : vector<2x32xf32> to vector<2x1x32xf32>
    %14 = vector.shape_cast %10 : vector<2x32xf32> to vector<2x1x32xf32>
    %15 = vector.shape_cast %11 : vector<2x32xf32> to vector<2x1x32xf32>
    %16 = tpu.concatenate %12, %13, %14, %15 in 1 : vector<2x1x32xf32>, vector<2x1x32xf32>, vector<2x1x32xf32>, vector<2x1x32xf32> -> vector<2x4x32xf32>
    %17 = vector.extract_strided_slice %7 {offsets = [0, 128], sizes = [2, 32], strides = [1, 1]} : vector<2x408xf32> to vector<2x32xf32>
    %18 = vector.extract_strided_slice %7 {offsets = [0, 160], sizes = [2, 32], strides = [1, 1]} : vector<2x408xf32> to vector<2x32xf32>
    %19 = vector.extract_strided_slice %7 {offsets = [0, 192], sizes = [2, 32], strides = [1, 1]} : vector<2x408xf32> to vector<2x32xf32>
    %20 = vector.extract_strided_slice %7 {offsets = [0, 224], sizes = [2, 32], strides = [1, 1]} : vector<2x408xf32> to vector<2x32xf32>
    %21 = vector.shape_cast %17 : vector<2x32xf32> to vector<2x1x32xf32>
    %22 = vector.shape_cast %18 : vector<2x32xf32> to vector<2x1x32xf32>
    %23 = vector.shape_cast %19 : vector<2x32xf32> to vector<2x1x32xf32>
    %24 = vector.shape_cast %20 : vector<2x32xf32> to vector<2x1x32xf32>
    %25 = tpu.concatenate %21, %22, %23, %24 in 1 : vector<2x1x32xf32>, vector<2x1x32xf32>, vector<2x1x32xf32>, vector<2x1x32xf32> -> vector<2x4x32xf32>
    %cst_11 = arith.constant 0.000000e+00 : f32
    %26 = vector.broadcast %cst_11 : f32 to vector<2x4x32xf32>
    %27 = arith.subf %26, %25 : vector<2x4x32xf32>
    %28 = math.exp %27 : vector<2x4x32xf32>
    %cst_12 = arith.constant 1.000000e+00 : f32
    %29 = vector.broadcast %cst_12 : f32 to vector<2x4x32xf32>
    %30 = arith.addf %29, %28 : vector<2x4x32xf32>
    %cst_13 = arith.constant 1.000000e+00 : f32
    %31 = vector.broadcast %cst_13 : f32 to vector<2x4x32xf32>
    %32 = arith.divf %31, %30 : vector<2x4x32xf32>
    %33 = vector.extract_strided_slice %7 {offsets = [0, 256], sizes = [2, 3], strides = [1, 1]} : vector<2x408xf32> to vector<2x3xf32>
    %34 = vector.extract_strided_slice %7 {offsets = [0, 259], sizes = [2, 3], strides = [1, 1]} : vector<2x408xf32> to vector<2x3xf32>
    %35 = vector.extract_strided_slice %7 {offsets = [0, 262], sizes = [2, 3], strides = [1, 1]} : vector<2x408xf32> to vector<2x3xf32>
    %36 = vector.extract_strided_slice %7 {offsets = [0, 265], sizes = [2, 3], strides = [1, 1]} : vector<2x408xf32> to vector<2x3xf32>
    %37 = vector.shape_cast %33 : vector<2x3xf32> to vector<2x1x3xf32>
    %38 = vector.shape_cast %34 : vector<2x3xf32> to vector<2x1x3xf32>
    %39 = vector.shape_cast %35 : vector<2x3xf32> to vector<2x1x3xf32>
    %40 = vector.shape_cast %36 : vector<2x3xf32> to vector<2x1x3xf32>
    %41 = tpu.concatenate %37, %38, %39, %40 in 1 : vector<2x1x3xf32>, vector<2x1x3xf32>, vector<2x1x3xf32>, vector<2x1x3xf32> -> vector<2x4x3xf32>
    %42 = vector.extract_strided_slice %7 {offsets = [0, 268], sizes = [2, 3], strides = [1, 1]} : vector<2x408xf32> to vector<2x3xf32>
    %43 = vector.extract_strided_slice %7 {offsets = [0, 271], sizes = [2, 3], strides = [1, 1]} : vector<2x408xf32> to vector<2x3xf32>
    %44 = vector.extract_strided_slice %7 {offsets = [0, 274], sizes = [2, 3], strides = [1, 1]} : vector<2x408xf32> to vector<2x3xf32>
    %45 = vector.extract_strided_slice %7 {offsets = [0, 277], sizes = [2, 3], strides = [1, 1]} : vector<2x408xf32> to vector<2x3xf32>
    %46 = vector.shape_cast %42 : vector<2x3xf32> to vector<2x1x3xf32>
    %47 = vector.shape_cast %43 : vector<2x3xf32> to vector<2x1x3xf32>
    %48 = vector.shape_cast %44 : vector<2x3xf32> to vector<2x1x3xf32>
    %49 = vector.shape_cast %45 : vector<2x3xf32> to vector<2x1x3xf32>
    %50 = tpu.concatenate %46, %47, %48, %49 in 1 : vector<2x1x3xf32>, vector<2x1x3xf32>, vector<2x1x3xf32>, vector<2x1x3xf32> -> vector<2x4x3xf32>
    %cst_14 = arith.constant dense<0xFF800000> : vector<2x4xf32>
    %51 = vector.multi_reduction <maximumf>, %50, %cst_14 [2] : vector<2x4x3xf32> to vector<2x4xf32>
    %52 = vector.shape_cast %51 : vector<2x4xf32> to vector<2x4x1xf32>
    %53 = vector.broadcast %52 : vector<2x4x1xf32> to vector<2x4x3xf32>
    %54 = arith.subf %50, %53 : vector<2x4x3xf32>
    %55 = math.exp %54 : vector<2x4x3xf32>
    %cst_15 = arith.constant dense<0.000000e+00> : vector<2x4xf32>
    %56 = vector.multi_reduction <add>, %55, %cst_15 [2] : vector<2x4x3xf32> to vector<2x4xf32>
    %57 = vector.shape_cast %56 : vector<2x4xf32> to vector<2x4x1xf32>
    %58 = tpu.reciprocal %57 {approx = true} : vector<2x4x1xf32> -> vector<2x4x1xf32>
    %59 = vector.broadcast %58 : vector<2x4x1xf32> to vector<2x4x3xf32>
    %60 = arith.mulf %55, %59 : vector<2x4x3xf32>
    %61 = vector.extract_strided_slice %7 {offsets = [0, 280], sizes = [2, 32], strides = [1, 1]} : vector<2x408xf32> to vector<2x32xf32>
    %62 = vector.extract_strided_slice %7 {offsets = [0, 312], sizes = [2, 32], strides = [1, 1]} : vector<2x408xf32> to vector<2x32xf32>
    %63 = vector.extract_strided_slice %7 {offsets = [0, 344], sizes = [2, 32], strides = [1, 1]} : vector<2x408xf32> to vector<2x32xf32>
    %64 = vector.extract_strided_slice %7 {offsets = [0, 376], sizes = [2, 32], strides = [1, 1]} : vector<2x408xf32> to vector<2x32xf32>
    %65 = vector.shape_cast %61 : vector<2x32xf32> to vector<2x1x32xf32>
    %66 = vector.shape_cast %62 : vector<2x32xf32> to vector<2x1x32xf32>
    %67 = vector.shape_cast %63 : vector<2x32xf32> to vector<2x1x32xf32>
    %68 = vector.shape_cast %64 : vector<2x32xf32> to vector<2x1x32xf32>
    %69 = tpu.concatenate %65, %66, %67, %68 in 1 : vector<2x1x32xf32>, vector<2x1x32xf32>, vector<2x1x32xf32>, vector<2x1x32xf32> -> vector<2x4x32xf32>
    %70 = vector.extract_strided_slice %41 {offsets = [0, 0, 0], sizes = [2, 4, 1], strides = [1, 1, 1]} : vector<2x4x3xf32> to vector<2x4x1xf32>
    %cst_16 = arith.constant 0.000000e+00 : f32
    %71 = vector.broadcast %cst_16 : f32 to vector<2x4x1xf32>
    %72 = arith.maximumf %70, %71 : vector<2x4x1xf32>
    %73 = math.absf %70 : vector<2x4x1xf32>
    %cst_17 = arith.constant 0.000000e+00 : f32
    %74 = vector.broadcast %cst_17 : f32 to vector<2x4x1xf32>
    %75 = arith.subf %74, %73 : vector<2x4x1xf32>
    %76 = math.exp %75 : vector<2x4x1xf32>
    %cst_18 = arith.constant 1.000000e+00 : f32
    %77 = vector.broadcast %cst_18 : f32 to vector<2x4x1xf32>
    %78 = arith.addf %77, %76 : vector<2x4x1xf32>
    %79 = math.log %78 : vector<2x4x1xf32>
    %80 = arith.addf %72, %79 : vector<2x4x1xf32>
    %81 = vector.extract_strided_slice %41 {offsets = [0, 0, 1], sizes = [2, 4, 1], strides = [1, 1, 1]} : vector<2x4x3xf32> to vector<2x4x1xf32>
    %cst_19 = arith.constant 0.000000e+00 : f32
    %82 = vector.broadcast %cst_19 : f32 to vector<2x4x1xf32>
    %83 = arith.subf %82, %81 : vector<2x4x1xf32>
    %84 = math.exp %83 : vector<2x4x1xf32>
    %cst_20 = arith.constant 1.000000e+00 : f32
    %85 = vector.broadcast %cst_20 : f32 to vector<2x4x1xf32>
    %86 = arith.addf %85, %84 : vector<2x4x1xf32>
    %cst_21 = arith.constant 1.000000e+00 : f32
    %87 = vector.broadcast %cst_21 : f32 to vector<2x4x1xf32>
    %88 = arith.divf %87, %86 : vector<2x4x1xf32>
    %89 = vector.extract_strided_slice %41 {offsets = [0, 0, 2], sizes = [2, 4, 1], strides = [1, 1, 1]} : vector<2x4x3xf32> to vector<2x4x1xf32>
    %cst_22 = arith.constant 0.000000e+00 : f32
    %90 = vector.broadcast %cst_22 : f32 to vector<2x4x1xf32>
    %91 = arith.maximumf %89, %90 : vector<2x4x1xf32>
    %92 = math.absf %89 : vector<2x4x1xf32>
    %cst_23 = arith.constant 0.000000e+00 : f32
    %93 = vector.broadcast %cst_23 : f32 to vector<2x4x1xf32>
    %94 = arith.subf %93, %92 : vector<2x4x1xf32>
    %95 = math.exp %94 : vector<2x4x1xf32>
    %cst_24 = arith.constant 1.000000e+00 : f32
    %96 = vector.broadcast %cst_24 : f32 to vector<2x4x1xf32>
    %97 = arith.addf %96, %95 : vector<2x4x1xf32>
    %98 = math.log %97 : vector<2x4x1xf32>
    %99 = arith.addf %91, %98 : vector<2x4x1xf32>
    %cst_25 = arith.constant 1.000000e+00 : f32
    %100 = vector.broadcast %cst_25 : f32 to vector<2x4x1xf32>
    %101 = arith.addf %100, %99 : vector<2x4x1xf32>
    %102 = arith.mulf %1, %1 : vector<2x16x32xf32>
    %cst_26 = arith.constant dense<0.000000e+00> : vector<2x16xf32>
    %103 = vector.multi_reduction <add>, %102, %cst_26 [2] : vector<2x16x32xf32> to vector<2x16xf32>
    %cst_27 = arith.constant 9.99999993E-9 : f32
    %104 = vector.broadcast %cst_27 : f32 to vector<2x16xf32>
    %105 = arith.addf %103, %104 : vector<2x16xf32>
    %106 = math.sqrt %105 : vector<2x16xf32>
    "tpu.trace_start"() <{level = 10 : i32, message = "bhw,bnw->bhn"}> : () -> ()
    %cst_28 = arith.constant dense<0.000000e+00> : vector<2x4x16xf32>
    %107 = tpu.matmul %16, %1, %cst_28 {dimension_numbers = #tpu.dot_dimension_numbers<[2], [2], [1], [1], [0, 0, 0, 1, 1, 1], [0], [0]>} : vector<2x4x32xf32>, vector<2x16x32xf32>, vector<2x4x16xf32> -> vector<2x4x16xf32>
    "tpu.trace_stop"() : () -> ()
    %108 = arith.mulf %16, %16 : vector<2x4x32xf32>
    %cst_29 = arith.constant dense<0.000000e+00> : vector<2x4xf32>
    %109 = vector.multi_reduction <add>, %108, %cst_29 [2] : vector<2x4x32xf32> to vector<2x4xf32>
    %110 = vector.shape_cast %109 : vector<2x4xf32> to vector<2x4x1xf32>
    %cst_30 = arith.constant 9.99999993E-9 : f32
    %111 = vector.broadcast %cst_30 : f32 to vector<2x4x1xf32>
    %112 = arith.addf %110, %111 : vector<2x4x1xf32>
    %113 = math.sqrt %112 : vector<2x4x1xf32>
    %114 = vector.shape_cast %106 : vector<2x16xf32> to vector<2x1x16xf32>
    %115 = vector.broadcast %113 : vector<2x4x1xf32> to vector<2x4x16xf32>
    %116 = vector.broadcast %114 : vector<2x1x16xf32> to vector<2x4x16xf32>
    %117 = arith.mulf %115, %116 : vector<2x4x16xf32>
    %cst_31 = arith.constant 9.99999993E-9 : f32
    %118 = vector.broadcast %cst_31 : f32 to vector<2x4x16xf32>
    %119 = arith.addf %117, %118 : vector<2x4x16xf32>
    %120 = tpu.reciprocal %119 {approx = true} : vector<2x4x16xf32> -> vector<2x4x16xf32>
    %121 = arith.mulf %107, %120 : vector<2x4x16xf32>
    %122 = vector.broadcast %80 : vector<2x4x1xf32> to vector<2x4x16xf32>
    %123 = arith.mulf %122, %121 : vector<2x4x16xf32>
    %cst_32 = arith.constant dense<0xFF800000> : vector<2x4xf32>
    %124 = vector.multi_reduction <maximumf>, %123, %cst_32 [2] : vector<2x4x16xf32> to vector<2x4xf32>
    %125 = vector.shape_cast %124 : vector<2x4xf32> to vector<2x4x1xf32>
    %126 = vector.broadcast %125 : vector<2x4x1xf32> to vector<2x4x16xf32>
    %127 = arith.subf %123, %126 : vector<2x4x16xf32>
    %128 = math.exp %127 : vector<2x4x16xf32>
    %cst_33 = arith.constant dense<0.000000e+00> : vector<2x4xf32>
    %129 = vector.multi_reduction <add>, %128, %cst_33 [2] : vector<2x4x16xf32> to vector<2x4xf32>
    %130 = vector.shape_cast %129 : vector<2x4xf32> to vector<2x4x1xf32>
    %131 = tpu.reciprocal %130 {approx = true} : vector<2x4x1xf32> -> vector<2x4x1xf32>
    %132 = vector.broadcast %131 : vector<2x4x1xf32> to vector<2x4x16xf32>
    %133 = arith.mulf %128, %132 : vector<2x4x16xf32>
    %134 = vector.broadcast %88 : vector<2x4x1xf32> to vector<2x4x16xf32>
    %135 = arith.mulf %134, %133 : vector<2x4x16xf32>
    %cst_34 = arith.constant 1.000000e+00 : f32
    %136 = vector.broadcast %cst_34 : f32 to vector<2x4x1xf32>
    %137 = arith.subf %136, %88 : vector<2x4x1xf32>
    %138 = vector.broadcast %137 : vector<2x4x1xf32> to vector<2x4x16xf32>
    %139 = arith.mulf %138, %2 : vector<2x4x16xf32>
    %140 = arith.addf %135, %139 : vector<2x4x16xf32>
    %cst_35 = arith.constant 0.000000e+00 : f32
    %141 = vector.broadcast %cst_35 : f32 to vector<2x4x16xf32>
    %142 = vector.extract_strided_slice %60 {offsets = [0, 0, 0], sizes = [2, 4, 1], strides = [1, 1, 1]} : vector<2x4x3xf32> to vector<2x4x1xf32>
    %143 = vector.extract_strided_slice %140 {offsets = [0, 0, 1], sizes = [2, 4, 15], strides = [1, 1, 1]} : vector<2x4x16xf32> to vector<2x4x15xf32>
    %144 = vector.extract_strided_slice %140 {offsets = [0, 0, 0], sizes = [2, 4, 1], strides = [1, 1, 1]} : vector<2x4x16xf32> to vector<2x4x1xf32>
    %145 = tpu.concatenate %143, %144 in 2 : vector<2x4x15xf32>, vector<2x4x1xf32> -> vector<2x4x16xf32>
    %146 = vector.broadcast %142 : vector<2x4x1xf32> to vector<2x4x16xf32>
    %147 = arith.mulf %146, %145 : vector<2x4x16xf32>
    %148 = arith.addf %141, %147 : vector<2x4x16xf32>
    %149 = vector.extract_strided_slice %60 {offsets = [0, 0, 1], sizes = [2, 4, 1], strides = [1, 1, 1]} : vector<2x4x3xf32> to vector<2x4x1xf32>
    %150 = vector.broadcast %149 : vector<2x4x1xf32> to vector<2x4x16xf32>
    %151 = arith.mulf %150, %140 : vector<2x4x16xf32>
    %152 = arith.addf %148, %151 : vector<2x4x16xf32>
    %153 = vector.extract_strided_slice %60 {offsets = [0, 0, 2], sizes = [2, 4, 1], strides = [1, 1, 1]} : vector<2x4x3xf32> to vector<2x4x1xf32>
    %154 = vector.extract_strided_slice %140 {offsets = [0, 0, 15], sizes = [2, 4, 1], strides = [1, 1, 1]} : vector<2x4x16xf32> to vector<2x4x1xf32>
    %155 = vector.extract_strided_slice %140 {offsets = [0, 0, 0], sizes = [2, 4, 15], strides = [1, 1, 1]} : vector<2x4x16xf32> to vector<2x4x15xf32>
    %156 = tpu.concatenate %154, %155 in 2 : vector<2x4x1xf32>, vector<2x4x15xf32> -> vector<2x4x16xf32>
    %157 = vector.broadcast %153 : vector<2x4x1xf32> to vector<2x4x16xf32>
    %158 = arith.mulf %157, %156 : vector<2x4x16xf32>
    %159 = arith.addf %152, %158 : vector<2x4x16xf32>
    %cst_36 = arith.constant 9.99999996E-13 : f32
    %160 = vector.broadcast %cst_36 : f32 to vector<2x4x16xf32>
    %161 = arith.addf %159, %160 : vector<2x4x16xf32>
    %162 = math.log %161 : vector<2x4x16xf32>
    %163 = vector.broadcast %101 : vector<2x4x1xf32> to vector<2x4x16xf32>
    %164 = arith.mulf %163, %162 : vector<2x4x16xf32>
    %165 = math.exp %164 : vector<2x4x16xf32>
    %cst_37 = arith.constant dense<0.000000e+00> : vector<2x4xf32>
    %166 = vector.multi_reduction <add>, %165, %cst_37 [2] : vector<2x4x16xf32> to vector<2x4xf32>
    %167 = vector.shape_cast %166 : vector<2x4xf32> to vector<2x4x1xf32>
    %168 = tpu.reciprocal %167 {approx = true} : vector<2x4x1xf32> -> vector<2x4x1xf32>
    %169 = vector.broadcast %168 : vector<2x4x1xf32> to vector<2x4x16xf32>
    %170 = arith.mulf %165, %169 : vector<2x4x16xf32>
    %171 = vector.shape_cast %32 : vector<2x4x32xf32> to vector<2x4x1x32xf32>
    %172 = vector.shape_cast %170 : vector<2x4x16xf32> to vector<2x4x16x1xf32>
    %173 = vector.broadcast %171 : vector<2x4x1x32xf32> to vector<2x4x16x32xf32>
    %174 = vector.broadcast %172 : vector<2x4x16x1xf32> to vector<2x4x16x32xf32>
    %175 = arith.mulf %173, %174 : vector<2x4x16x32xf32>
    %cst_38 = arith.constant 1.000000e+00 : f32
    %176 = vector.broadcast %cst_38 : f32 to vector<2x4x16x32xf32>
    %177 = arith.subf %176, %175 : vector<2x4x16x32xf32>
    %178 = vector.shape_cast %69 : vector<2x4x32xf32> to vector<2x4x1x32xf32>
    %179 = vector.shape_cast %170 : vector<2x4x16xf32> to vector<2x4x16x1xf32>
    %180 = vector.broadcast %178 : vector<2x4x1x32xf32> to vector<2x4x16x32xf32>
    %181 = vector.broadcast %179 : vector<2x4x16x1xf32> to vector<2x4x16x32xf32>
    %182 = arith.mulf %180, %181 : vector<2x4x16x32xf32>
    %183 = vector.extract_strided_slice %177 {offsets = [0, 0, 0, 0], sizes = [2, 1, 16, 32], strides = [1, 1, 1, 1]} : vector<2x4x16x32xf32> to vector<2x1x16x32xf32>
    %184 = vector.shape_cast %183 : vector<2x1x16x32xf32> to vector<2x16x32xf32>
    %185 = arith.mulf %1, %184 : vector<2x16x32xf32>
    %186 = vector.extract_strided_slice %182 {offsets = [0, 0, 0, 0], sizes = [2, 1, 16, 32], strides = [1, 1, 1, 1]} : vector<2x4x16x32xf32> to vector<2x1x16x32xf32>
    %187 = vector.shape_cast %186 : vector<2x1x16x32xf32> to vector<2x16x32xf32>
    %188 = vector.extract_strided_slice %177 {offsets = [0, 1, 0, 0], sizes = [2, 1, 16, 32], strides = [1, 1, 1, 1]} : vector<2x4x16x32xf32> to vector<2x1x16x32xf32>
    %189 = vector.shape_cast %188 : vector<2x1x16x32xf32> to vector<2x16x32xf32>
    %190 = arith.mulf %1, %189 : vector<2x16x32xf32>
    %191 = arith.mulf %185, %190 : vector<2x16x32xf32>
    %192 = vector.extract_strided_slice %182 {offsets = [0, 1, 0, 0], sizes = [2, 1, 16, 32], strides = [1, 1, 1, 1]} : vector<2x4x16x32xf32> to vector<2x1x16x32xf32>
    %193 = vector.shape_cast %192 : vector<2x1x16x32xf32> to vector<2x16x32xf32>
    %194 = arith.addf %187, %193 : vector<2x16x32xf32>
    %195 = vector.extract_strided_slice %177 {offsets = [0, 2, 0, 0], sizes = [2, 1, 16, 32], strides = [1, 1, 1, 1]} : vector<2x4x16x32xf32> to vector<2x1x16x32xf32>
    %196 = vector.shape_cast %195 : vector<2x1x16x32xf32> to vector<2x16x32xf32>
    %197 = arith.mulf %1, %196 : vector<2x16x32xf32>
    %198 = arith.mulf %191, %197 : vector<2x16x32xf32>
    %199 = vector.extract_strided_slice %182 {offsets = [0, 2, 0, 0], sizes = [2, 1, 16, 32], strides = [1, 1, 1, 1]} : vector<2x4x16x32xf32> to vector<2x1x16x32xf32>
    %200 = vector.shape_cast %199 : vector<2x1x16x32xf32> to vector<2x16x32xf32>
    %201 = arith.addf %194, %200 : vector<2x16x32xf32>
    %202 = vector.extract_strided_slice %177 {offsets = [0, 3, 0, 0], sizes = [2, 1, 16, 32], strides = [1, 1, 1, 1]} : vector<2x4x16x32xf32> to vector<2x1x16x32xf32>
    %203 = vector.shape_cast %202 : vector<2x1x16x32xf32> to vector<2x16x32xf32>
    %204 = arith.mulf %1, %203 : vector<2x16x32xf32>
    %205 = arith.mulf %198, %204 : vector<2x16x32xf32>
    %206 = vector.extract_strided_slice %182 {offsets = [0, 3, 0, 0], sizes = [2, 1, 16, 32], strides = [1, 1, 1, 1]} : vector<2x4x16x32xf32> to vector<2x1x16x32xf32>
    %207 = vector.shape_cast %206 : vector<2x1x16x32xf32> to vector<2x16x32xf32>
    %208 = arith.addf %201, %207 : vector<2x16x32xf32>
    %c0_39 = arith.constant 0 : index
    %c0_40 = arith.constant 0 : index
    %c0_41 = arith.constant 0 : index
    %209 = vector.load %arg5[%c0_39, %c0_40, %c0_41] : memref<2x4x16xf32, #tpu.memory_space<vmem>>, vector<2x4x16xf32>
    tpu.vector_store %arg5[%c0_39, %c0_40, %c0_41], %170 {strides = array<i32>} : memref<2x4x16xf32, #tpu.memory_space<vmem>>, vector<2x4x16xf32>,
    %210 = arith.addf %205, %208 : vector<2x16x32xf32>
    %c0_42 = arith.constant 0 : index
    %c0_43 = arith.constant 0 : index
    %c0_44 = arith.constant 0 : index
    %211 = vector.load %arg6[%c0_42, %c0_43, %c0_44] : memref<2x16x32xf32, #tpu.memory_space<vmem>>, vector<2x16x32xf32>
    tpu.vector_store %arg6[%c0_42, %c0_43, %c0_44], %210 {strides = array<i32>} : memref<2x16x32xf32, #tpu.memory_space<vmem>>, vector<2x16x32xf32>,
    return
  }
}

</mosaic_0001>

<llo_original>
// kernel: writer_forward.1
$region0: #{writer_forward.1}
  #allocation0 [shape = 'u32[]', space=smem, size = 0x4, offset = 0x4, fixed_abs, tag = 'smem constant byte address 0x4 - core index']
  #allocation1 [shape = 'u32[144,128]{1,0:T(1,128)}', space=vmem, size = 0x12000, scoped, tag = 'internal scratch']
  %s0 = inlined_call_operand.vmem [shape: f32[2,112], index: 0, kind: input, shape index: {}]
  %s1 = inlined_call_operand.vmem [shape: f32[2,16,32], index: 1, kind: input, shape index: {}]
  %s2 = inlined_call_operand.vmem [shape: f32[2,4,16], index: 2, kind: input, shape index: {}]
  %s3 = inlined_call_operand.vmem [shape: f32[112,408], index: 3, kind: input, shape index: {}]
  %s4 = inlined_call_operand.vmem [shape: f32[1,408], index: 4, kind: input, shape index: {}]
  %s5 = inlined_call_operand.hbm [shape: f32[2,4,16], index: 5, kind: output, shape index: {0}]
  %s6 = inlined_call_operand.hbm [shape: f32[2,16,32], index: 6, kind: output, shape index: {1}]
  %7 = xla_tuple %s5, %s6
  %s8 = sld [smem:[#allocation0]]
  $region38: #{writer_forward.1} parent=0
    _
  %s10 = ssub.s32 1, %s8
  %s11 = scalar_select 0, %s10, %s8
  $region1: #{writer_forward.1} parent=0
    #allocation2 [shape = 'u8[4096]{0}', space=vmem, size = 0x1000, scoped, tag = 'output window, operand 0, single buffered']
    #allocation3 [shape = 's32[1]{0}', space=sflag, size = 0x4, scoped, tag = 'scoped memory for writer_forward.1']
    #allocation4 [shape = 'u8[16384]{0}', space=vmem, size = 0x4000, scoped, tag = 'output window, operand 1, single buffered']
    #allocation5 [shape = 's32[1]{0}', space=sflag, size = 0x4, scoped, tag = 'scoped memory for writer_forward.1']
    %12 = vsyncpa [#allocation3], 0
    %13 = vsyncpa [#allocation5], 0
    // Predicated region
    $region2: #{writer_forward.1} parent=1 // pred_check
      _
    $region3: #{writer_forward.1} parent=1 // pred_check_branch
      %15 = sbr.rel (0) target = $region5
    $region4: #{writer_forward.1} parent=1 // pred_region
      _
    $region5: #{writer_forward.1} parent=1 // pred_fallthru
      _
    // Predicated region
    $region6: #{writer_forward.1} parent=1 // pred_check
      _
    $region7: #{writer_forward.1} parent=1 // pred_check_branch
      %17 = sbr.rel (0) target = $region9
    $region8: #{writer_forward.1} parent=1 // pred_region
      _
    $region9: #{writer_forward.1} parent=1 // pred_fallthru
      _
    // Predicated region
    $region10: #{writer_forward.1} parent=1 // pred_check
      _
    $region11: #{writer_forward.1} parent=1 // pred_check_branch
      %19 = sbr.rel (0) target = $region13
    $region12: #{writer_forward.1} parent=1 // pred_region
      _
    $region13: #{writer_forward.1} parent=1 // pred_fallthru
      _
    // Predicated region
    $region14: #{writer_forward.1} parent=1 // pred_check
      _
    $region15: #{writer_forward.1} parent=1 // pred_check_branch
      %21 = sbr.rel (0) target = $region17
    $region16: #{writer_forward.1} parent=1 // pred_region
      _
    $region17: #{writer_forward.1} parent=1 // pred_fallthru
      _
    // Predicated region
    $region18: #{writer_forward.1} parent=1 // pred_check
      _
    $region19: #{writer_forward.1} parent=1 // pred_check_branch
      %23 = sbr.rel (0) target = $region21
    $region20: #{writer_forward.1} parent=1 // pred_region
      _
    $region21: #{writer_forward.1} parent=1 // pred_fallthru
      _
    %v24 = vld [vmem:[%s0] sm:$0x3]
    %v25 = vld [vmem:[%s1] sm:$0xff]
    %v26 = vld [vmem:[%s1 + $0x8] sm:$0xff]
    %v27 = vld [vmem:[%s1 + $0x10] sm:$0xff]
    %v28 = vld [vmem:[%s1 + $0x18] sm:$0xff]
    %v29 = vld [vmem:[%s2] sm:$0xf]
    %v30 = vld [vmem:[%s2 + $0x4] sm:$0xf]
    %v31 = vld [vmem:[%s3] sm:$0xff]
    %v32 = vld [vmem:[%s3 + $0x8] sm:$0xff]
    %v33 = vld [vmem:[%s3 + $0x10] sm:$0xff]
    %v34 = vld [vmem:[%s3 + $0x18] sm:$0xff]
    %v35 = vld [vmem:[%s3 + $0x20] sm:$0xff]
    %v36 = vld [vmem:[%s3 + $0x28] sm:$0xff]
    %v37 = vld [vmem:[%s3 + $0x30] sm:$0xff]
    %v38 = vld [vmem:[%s3 + $0x38] sm:$0xff]
    %v39 = vld [vmem:[%s3 + $0x40] sm:$0xff]
    %v40 = vld [vmem:[%s3 + $0x48] sm:$0xff]
    %v41 = vld [vmem:[%s3 + $0x50] sm:$0xff]
    %v42 = vld [vmem:[%s3 + $0x58] sm:$0xff]
    %v43 = vld [vmem:[%s3 + $0x60] sm:$0xff]
    %v44 = vld [vmem:[%s3 + $0x68] sm:$0xff]
    %v45 = vld [vmem:[%s3 + $0x70] sm:$0xff]
    %v46 = vld [vmem:[%s3 + $0x78] sm:$0xff]
    %v47 = vld [vmem:[%s3 + $0x80] sm:$0xff]
    %v48 = vld [vmem:[%s3 + $0x88] sm:$0xff]
    %v49 = vld [vmem:[%s3 + $0x90] sm:$0xff]
    %v50 = vld [vmem:[%s3 + $0x98] sm:$0xff]
    %v51 = vld [vmem:[%s3 + $0xa0] sm:$0xff]
    %v52 = vld [vmem:[%s3 + $0xa8] sm:$0xff]
    %v53 = vld [vmem:[%s3 + $0xb0] sm:$0xff]
    %v54 = vld [vmem:[%s3 + $0xb8] sm:$0xff]
    %v55 = vld [vmem:[%s3 + $0xc0] sm:$0xff]
    %v56 = vld [vmem:[%s3 + $0xc8] sm:$0xff]
    %v57 = vld [vmem:[%s3 + $0xd0] sm:$0xff]
    %v58 = vld [vmem:[%s3 + $0xd8] sm:$0xff]
    %v59 = vld [vmem:[%s3 + $0xe0] sm:$0xff]
    %v60 = vld [vmem:[%s3 + $0xe8] sm:$0xff]
    %v61 = vld [vmem:[%s3 + $0xf0] sm:$0xff]
    %v62 = vld [vmem:[%s3 + $0xf8] sm:$0xff]
    %v63 = vld [vmem:[%s3 + $0x100] sm:$0xff]
    %v64 = vld [vmem:[%s3 + $0x108] sm:$0xff]
    %v65 = vld [vmem:[%s3 + $0x110] sm:$0xff]
    %v66 = vld [vmem:[%s3 + $0x118] sm:$0xff]
    %v67 = vld [vmem:[%s3 + $0x120] sm:$0xff]
    %v68 = vld [vmem:[%s3 + $0x128] sm:$0xff]
    %v69 = vld [vmem:[%s3 + $0x130] sm:$0xff]
    %v70 = vld [vmem:[%s3 + $0x138] sm:$0xff]
    %v71 = vld [vmem:[%s3 + $0x140] sm:$0xff]
    %v72 = vld [vmem:[%s3 + $0x148] sm:$0xff]
    %v73 = vld [vmem:[%s3 + $0x150] sm:$0xff]
    %v74 = vld [vmem:[%s3 + $0x158] sm:$0xff]
    %v75 = vld [vmem:[%s3 + $0x160] sm:$0xff]
    %v76 = vld [vmem:[%s3 + $0x168] sm:$0xff]
    %v77 = vld [vmem:[%s3 + $0x170] sm:$0xff]
    %v78 = vld [vmem:[%s3 + $0x178] sm:$0xff]
    %v79 = vld [vmem:[%s3 + $0x180] sm:$0xff]
    %v80 = vld [vmem:[%s3 + $0x188] sm:$0xff]
    %v81 = vld [vmem:[%s3 + $0x190] sm:$0xff]
    %v82 = vld [vmem:[%s3 + $0x198] sm:$0xff]
    %v83 = vld [vmem:[%s3 + $0x1a0] sm:$0xff]
    %v84 = vld [vmem:[%s3 + $0x1a8] sm:$0xff]
    %v85 = vld [vmem:[%s3 + $0x1b0] sm:$0xff]
    %v86 = vld [vmem:[%s3 + $0x1b8] sm:$0xff]
    %v87 = vld [vmem:[%s4] sm:$0xf]
    %v89 = vlaneseq
    %v90 = vshrl.u32 %v89, 7
    %v91 = vsub.s32 0, %v90
    %v92 = vrot.slane %v87, %v91
    %v93 = vlaneseq
    %v94 = vshrl.u32 %v93, 7
    %v95 = vsub.s32 1, %v94
    %v96 = vrot.slane %v87, %v95
    %v97 = vlaneseq
    %v98 = vshrl.u32 %v97, 7
    %v99 = vsub.s32 2, %v98
    %v100 = vrot.slane %v87, %v99
    %v101 = vlaneseq
    %v102 = vshrl.u32 %v101, 7
    %v103 = vsub.s32 3, %v102
    %v104 = vrot.slane %v87, %v103
    %vm109 = vcmask 916480
    %v111 = vsel %vm109, %v24, 0
    %113 = vmatprep.subr.mxu0 %v32
    %114 = vmatpush1.msra.mxu0 %v31
    %115 = vmatprep.subr.mxu0 %v36
    %116 = vmatpush1.msra.mxu0 %v35
    %117 = vmatprep.subr.mxu0 %v40
    %118 = vmatpush1.msra.mxu0 %v39
    %119 = vmatprep.subr.mxu0 %v44
    %120 = vmatpush1.msra.mxu0 %v43
    %121 = vmatprep.subr.mxu0 %v48
    %122 = vmatpush1.msra.mxu0 %v47
    %123 = vmatprep.subr.mxu0 %v52
    %124 = vmatpush1.msra.mxu0 %v51
    %125 = vmatprep.subr.mxu0 %v56
    %126 = vmatpush1.msra.mxu0 %v55
    %127 = vmatprep.subr.mxu0 %v60
    %128 = vmatpush1.msra.mxu0 %v59
    %129 = vmatprep.subr.mxu0 %v64
    %130 = vmatpush1.msra.mxu0 %v63
    %131 = vmatprep.subr.mxu0 %v68
    %132 = vmatpush1.msra.mxu0 %v67
    %133 = vmatprep.subr.mxu0 %v72
    %134 = vmatpush1.msra.mxu0 %v71
    %135 = vmatprep.subr.mxu0 %v76
    %136 = vmatpush1.msra.mxu0 %v75
    %137 = vmatprep.subr.mxu0 %v80
    %138 = vmatpush1.msra.mxu0 %v79
    %139 = vmatprep.subr.mxu0 %v84
    %140 = vmatpush1.msra.mxu0 %v83
    %141 = vmatprep.subr.mxu0 0.0
    %142 = vmatpush1.msra.mxu0 0.0
    %143 = vmatprep.subr.mxu0 0.0
    %144 = vmatpush1.msra.mxu0 0.0
    %145 = vmatprep.subr.mxu0 0.0
    %146 = vmatpush1.msra.mxu0 0.0
    %147 = vmatprep.subr.mxu0 0.0
    %148 = vmatpush1.msra.mxu0 0.0
    %149 = vmatprep.subr.mxu0 0.0
    %150 = vmatpush1.msra.mxu0 0.0
    %151 = vmatprep.subr.mxu0 0.0
    %152 = vmatpush1.msra.mxu0 0.0
    %153 = vmatprep.subr.mxu0 0.0
    %154 = vmatpush1.msra.mxu0 0.0
    %155 = vmatprep.subr.mxu0 0.0
    %156 = vmatpush1.msra.mxu0 0.0
    %157 = vmatprep.subr.mxu0 0.0
    %158 = vmatpush1.msra.mxu0 0.0
    %159 = vmatprep.subr.mxu0 0.0
    %160 = vmatpush1.msra.mxu0 0.0
    %161 = vmatprep.subr.mxu0 0.0
    %162 = vmatpush1.msra.mxu0 0.0
    %163 = vmatprep.subr.mxu0 0.0
    %164 = vmatpush1.msra.mxu0 0.0
    %165 = vmatprep.subr.mxu0 0.0
    %166 = vmatpush1.msra.mxu0 0.0
    %167 = vmatprep.subr.mxu0 0.0
    %168 = vmatpush1.msra.mxu0 0.0
    %169 = vmatprep.subr.mxu0 0.0
    %170 = vmatpush1.msra.mxu0 0.0
    %171 = vmatprep.subr.mxu0 0.0
    %172 = vmatpush1.msra.mxu0 0.0
    %173 = vmatprep.subr.mxu0 0.0
    %174 = vmatpush1.msra.mxu0 0.0
    %175 = vmatprep.subr.mxu0 0.0
    %176 = vmatpush1.msra.mxu0 0.0
    %177 = vmatprep.mubr.f32.mxu0 0.0
    %178 = vmatmul.mubr.f32.gmra.mrb[0].mxu0 %v111
    %v179 = vpop.f32.mrb[0].mxu0
    %v180 = vadd.f32 %v92, %v179
    %v181 = vpop.f32.mrb[0].mxu0
    %v182 = vadd.f32 %v96, %v181
    %183 = vdwg.mxu0
    %184 = vmatprep.subr.mxu0 %v34
    %185 = vmatpush1.msra.mxu0 %v33
    %186 = vmatprep.subr.mxu0 %v38
    %187 = vmatpush1.msra.mxu0 %v37
    %188 = vmatprep.subr.mxu0 %v42
    %189 = vmatpush1.msra.mxu0 %v41
    %190 = vmatprep.subr.mxu0 %v46
    %191 = vmatpush1.msra.mxu0 %v45
    %192 = vmatprep.subr.mxu0 %v50
    %193 = vmatpush1.msra.mxu0 %v49
    %194 = vmatprep.subr.mxu0 %v54
    %195 = vmatpush1.msra.mxu0 %v53
    %196 = vmatprep.subr.mxu0 %v58
    %197 = vmatpush1.msra.mxu0 %v57
    %198 = vmatprep.subr.mxu0 %v62
    %199 = vmatpush1.msra.mxu0 %v61
    %200 = vmatprep.subr.mxu0 %v66
    %201 = vmatpush1.msra.mxu0 %v65
    %202 = vmatprep.subr.mxu0 %v70
    %203 = vmatpush1.msra.mxu0 %v69
    %204 = vmatprep.subr.mxu0 %v74
    %205 = vmatpush1.msra.mxu0 %v73
    %206 = vmatprep.subr.mxu0 %v78
    %207 = vmatpush1.msra.mxu0 %v77
    %208 = vmatprep.subr.mxu0 %v82
    %209 = vmatpush1.msra.mxu0 %v81
    %210 = vmatprep.subr.mxu0 %v86
    %211 = vmatpush1.msra.mxu0 %v85
    %212 = vmatprep.subr.mxu0 0.0
    %213 = vmatpush1.msra.mxu0 0.0
    %214 = vmatprep.subr.mxu0 0.0
    %215 = vmatpush1.msra.mxu0 0.0
    %216 = vmatprep.subr.mxu0 0.0
    %217 = vmatpush1.msra.mxu0 0.0
    %218 = vmatprep.subr.mxu0 0.0
    %219 = vmatpush1.msra.mxu0 0.0
    %220 = vmatprep.subr.mxu0 0.0
    %221 = vmatpush1.msra.mxu0 0.0
    %222 = vmatprep.subr.mxu0 0.0
    %223 = vmatpush1.msra.mxu0 0.0
    %224 = vmatprep.subr.mxu0 0.0
    %225 = vmatpush1.msra.mxu0 0.0
    %226 = vmatprep.subr.mxu0 0.0
    %227 = vmatpush1.msra.mxu0 0.0
    %228 = vmatprep.subr.mxu0 0.0
    %229 = vmatpush1.msra.mxu0 0.0
    %230 = vmatprep.subr.mxu0 0.0
    %231 = vmatpush1.msra.mxu0 0.0
    %232 = vmatprep.subr.mxu0 0.0
    %233 = vmatpush1.msra.mxu0 0.0
    %234 = vmatprep.subr.mxu0 0.0
    %235 = vmatpush1.msra.mxu0 0.0
    %236 = vmatprep.subr.mxu0 0.0
    %237 = vmatpush1.msra.mxu0 0.0
    %238 = vmatprep.subr.mxu0 0.0
    %239 = vmatpush1.msra.mxu0 0.0
    %240 = vmatprep.subr.mxu0 0.0
    %241 = vmatpush1.msra.mxu0 0.0
    %242 = vmatprep.subr.mxu0 0.0
    %243 = vmatpush1.msra.mxu0 0.0
    %244 = vmatprep.subr.mxu0 0.0
    %245 = vmatpush1.msra.mxu0 0.0
    %246 = vmatprep.subr.mxu0 0.0
    %247 = vmatpush1.msra.mxu0 0.0
    %248 = vmatprep.mubr.f32.mxu0 0.0
    %249 = vmatmul.mubr.f32.gmra.mrb[0].mxu0 %v111
    %v250 = vpop.f32.mrb[0].mxu0
    %v251 = vadd.f32 %v100, %v250
    %v252 = vpop.f32.mrb[0].mxu0
    %v253 = vadd.f32 %v104, %v252
    %254 = vdwg.mxu0
    %v257 = vunpack.c.l.s4 1966171168
    %v258 = vunpack.c.0.s8 %v257
    %v259 = vlaneseq
    %v260 = vshrl.u32 %v259, 7
    %v261 = vsub.s32 %v258, %v260
    %v262 = vrot.slane %v180, %v261
    %v263 = vcombine.high %v262, %v262
    %v265 = vunpack.c.l.s4 1966171168
    %v266 = vunpack.c.0.s8 %v265
    %v267 = vlaneseq
    %v268 = vshrl.u32 %v267, 7
    %v269 = vsub.s32 %v266, %v268
    %v270 = vrot.slane %v262, %v269
    %v272 = vunpack.c.l.s4 1966171168
    %v273 = vunpack.c.0.s8 %v272
    %v274 = vlaneseq
    %v275 = vshrl.u32 %v274, 7
    %v276 = vsub.s32 %v273, %v275
    %v277 = vrot.slane %v263, %v276
    %v280 = vlaneseq
    %v281 = vshrl.u32 %v280, 7
    %v282 = vsub.s32 0, %v281
    %v283 = vrot.slane %v270, %v282
    %v284 = vlaneseq
    %v285 = vshrl.u32 %v284, 7
    %v286 = vsub.s32 0, %v285
    %v287 = vrot.slane %v277, %v286
    %288 = vrot.lane.b32.xlu0 %v283, 96
    %v289 = vpop.permute.xlu0 %288
    %290 = vrot.lane.b32.xlu0 %v287, 96
    %v291 = vpop.permute.xlu0 %290
    %294 = vrot.lane.b32.xlu0 %v283, 64
    %v295 = vpop.permute.xlu0 %294
    %296 = vrot.lane.b32.xlu0 %v287, 64
    %v297 = vpop.permute.xlu0 %296
    %300 = vrot.lane.b32.xlu0 %v283, 32
    %v301 = vpop.permute.xlu0 %300
    %302 = vrot.lane.b32.xlu0 %v287, 32
    %v303 = vpop.permute.xlu0 %302
    %vm306 = vcmask 1040384
    %v307 = vsel %vm306, %v270, %v289
    %v308 = vsel %vm306, %v277, %v291
    %vm309 = vcmask 1041408
    %v310 = vsel %vm309, %v307, %v295
    %v311 = vsel %vm309, %v308, %v297
    %vm312 = vcmask 1042432
    %v313 = vsel %vm312, %v310, %v301
    %v314 = vsel %vm312, %v311, %v303
    %v317 = vunpack.c.l.s4 1966171168
    %v318 = vunpack.c.0.s8 %v317
    %v319 = vlaneseq
    %v320 = vshrl.u32 %v319, 7
    %v321 = vsub.s32 %v318, %v320
    %v322 = vrot.slane %v182, %v321
    %v323 = vcombine.high %v322, %v322
    %v325 = vunpack.c.l.s4 1966171168
    %v326 = vunpack.c.0.s8 %v325
    %v327 = vlaneseq
    %v328 = vshrl.u32 %v327, 7
    %v329 = vsub.s32 %v326, %v328
    %v330 = vrot.slane %v322, %v329
    %v332 = vunpack.c.l.s4 1966171168
    %v333 = vunpack.c.0.s8 %v332
    %v334 = vlaneseq
    %v335 = vshrl.u32 %v334, 7
    %v336 = vsub.s32 %v333, %v335
    %v337 = vrot.slane %v323, %v336
    %v340 = vlaneseq
    %v341 = vshrl.u32 %v340, 7
    %v342 = vsub.s32 0, %v341
    %v343 = vrot.slane %v330, %v342
    %v344 = vlaneseq
    %v345 = vshrl.u32 %v344, 7
    %v346 = vsub.s32 0, %v345
    %v347 = vrot.slane %v337, %v346
    %348 = vrot.lane.b32.xlu0 %v343, 96
    %v349 = vpop.permute.xlu0 %348
    %350 = vrot.lane.b32.xlu0 %v347, 96
    %v351 = vpop.permute.xlu0 %350
    %354 = vrot.lane.b32.xlu0 %v343, 64
    %v355 = vpop.permute.xlu0 %354
    %356 = vrot.lane.b32.xlu0 %v347, 64
    %v357 = vpop.permute.xlu0 %356
    %360 = vrot.lane.b32.xlu0 %v343, 32
    %v361 = vpop.permute.xlu0 %360
    %362 = vrot.lane.b32.xlu0 %v347, 32
    %v363 = vpop.permute.xlu0 %362
    %v366 = vsel %vm306, %v330, %v349
    %v367 = vsel %vm306, %v337, %v351
    %v368 = vsel %vm309, %v366, %v355
    %v369 = vsel %vm309, %v367, %v357
    %v370 = vsel %vm312, %v368, %v361
    %v371 = vsel %vm312, %v369, %v363
    %v372 = vsub.f32 0.0, %v370
    %v373 = vsub.f32 0.0, %v371
    %v374 = vmul.f32 %v372, 1.442695
    %v375 = vpow.pop %v374
    %v376 = vmul.f32 %v373, 1.442695
    %v377 = vpow.pop %v376
    %v378 = vadd.f32 %v375, 1.0
    %v379 = vadd.f32 %v377, 1.0
    %v380 = vrcp.pop %v378
    %v381 = vmul.f32 1.0, %v380
    %v382 = vrcp.pop %v379
    %v383 = vmul.f32 1.0, %v382
    %v386 = vunpack.c.l.s4 1966171168
    %v387 = vunpack.c.0.s8 %v386
    %v388 = vlaneseq
    %v389 = vshrl.u32 %v388, 7
    %v390 = vsub.s32 %v387, %v389
    %v391 = vrot.slane %v251, %v390
    %v392 = vcombine.high %v391, %v391
    %v394 = vunpack.c.l.s4 1966171168
    %v395 = vunpack.c.0.s8 %v394
    %v396 = vlaneseq
    %v397 = vshrl.u32 %v396, 7
    %v398 = vsub.s32 %v395, %v397
    %v399 = vrot.slane %v391, %v398
    %v401 = vunpack.c.l.s4 1966171168
    %v402 = vunpack.c.0.s8 %v401
    %v403 = vlaneseq
    %v404 = vshrl.u32 %v403, 7
    %v405 = vsub.s32 %v402, %v404
    %v406 = vrot.slane %v392, %v405
    %v409 = vlaneseq
    %v410 = vshrl.u32 %v409, 7
    %v411 = vsub.s32 0, %v410
    %v412 = vrot.slane %v399, %v411
    %v413 = vlaneseq
    %v414 = vshrl.u32 %v413, 7
    %v415 = vsub.s32 0, %v414
    %v416 = vrot.slane %v406, %v415
    %417 = vrot.lane.b32.xlu0 %v412, 125
    %v418 = vpop.permute.xlu0 %417
    %419 = vrot.lane.b32.xlu0 %v416, 125
    %v420 = vpop.permute.xlu0 %419
    %423 = vrot.lane.b32.xlu0 %v412, 122
    %v424 = vpop.permute.xlu0 %423
    %425 = vrot.lane.b32.xlu0 %v416, 122
    %v426 = vpop.permute.xlu0 %425
    %429 = vrot.lane.b32.xlu0 %v412, 119
    %v430 = vpop.permute.xlu0 %429
    %431 = vrot.lane.b32.xlu0 %v416, 119
    %v432 = vpop.permute.xlu0 %431
    %v435 = vsel %vm306, %v399, %v418
    %v436 = vsel %vm306, %v406, %v420
    %v437 = vsel %vm309, %v435, %v424
    %v438 = vsel %vm309, %v436, %v426
    %v439 = vsel %vm312, %v437, %v430
    %v440 = vsel %vm312, %v438, %v432
    %vm441 = vcmask 117856
    %v442 = vsel %vm441, %v439, -inf
    %443 = vmax.xlane.f32.xlu0 %v442
    %v444 = vpop.xlane.xlu0 %443
    %v445 = vsel %vm441, %v440, -inf
    %446 = vmax.xlane.f32.xlu0 %v445
    %v447 = vpop.xlane.xlu0 %446
    %v448 = vsub.f32 %v439, %v444
    %v449 = vsub.f32 %v440, %v447
    %v450 = vmul.f32 %v448, 1.442695
    %v451 = vpow.pop %v450
    %v452 = vmul.f32 %v449, 1.442695
    %v453 = vpow.pop %v452
    %456 = vrot.lane.b32.xlu0 %v451, 116
    %v457 = vpop.permute.xlu0 %456
    %458 = vrot.lane.b32.xlu0 %v453, 116
    %v459 = vpop.permute.xlu0 %458
    %vm462 = vcmask 19456
    %v463 = vsel %vm462, %v457, 0.0
    %464 = vadd.xlane.f32.xlu0 %v463
    %v465 = vpop.xlane.xlu0 %464
    %v466 = vsel %vm462, %v459, 0.0
    %467 = vadd.xlane.f32.xlu0 %v466
    %v468 = vpop.xlane.xlu0 %467
    %v469 = vrcp.pop %v465
    %v470 = vrcp.pop %v468
    %v471 = vmul.f32 %v451, %v469
    %v472 = vmul.f32 %v453, %v470
    %v474 = vcombine.low %v251, %v253
    %v476 = vunpack.c.l.s4 1966171168
    %v477 = vunpack.c.0.s8 %v476
    %v478 = vlaneseq
    %v479 = vshrl.u32 %v478, 7
    %v480 = vsub.s32 %v477, %v479
    %v481 = vrot.slane %v474, %v480
    %v482 = vcombine.high %v481, %v481
    %v484 = vunpack.c.l.s4 1966171168
    %v485 = vunpack.c.0.s8 %v484
    %v486 = vlaneseq
    %v487 = vshrl.u32 %v486, 7
    %v488 = vsub.s32 %v485, %v487
    %v489 = vrot.slane %v481, %v488
    %v491 = vunpack.c.l.s4 1966171168
    %v492 = vunpack.c.0.s8 %v491
    %v493 = vlaneseq
    %v494 = vshrl.u32 %v493, 7
    %v495 = vsub.s32 %v492, %v494
    %v496 = vrot.slane %v482, %v495
    %497 = vrot.lane.b32.xlu0 %v412, 96
    %v498 = vpop.permute.xlu0 %497
    %499 = vrot.lane.b32.xlu0 %v416, 96
    %v500 = vpop.permute.xlu0 %499
    %503 = vrot.lane.b32.xlu0 %v412, 64
    %v504 = vpop.permute.xlu0 %503
    %505 = vrot.lane.b32.xlu0 %v416, 64
    %v506 = vpop.permute.xlu0 %505
    %v509 = vlaneseq
    %v510 = vshrl.u32 %v509, 7
    %v511 = vsub.s32 0, %v510
    %v512 = vrot.slane %v489, %v511
    %v513 = vlaneseq
    %v514 = vshrl.u32 %v513, 7
    %v515 = vsub.s32 1, %v514
    %v516 = vrot.slane %v489, %v515
    %v517 = vlaneseq
    %v518 = vshrl.u32 %v517, 7
    %v519 = vsub.s32 0, %v518
    %v520 = vrot.slane %v496, %v519
    %v521 = vlaneseq
    %v522 = vshrl.u32 %v521, 7
    %v523 = vsub.s32 1, %v522
    %v524 = vrot.slane %v496, %v523
    %525 = vrot.lane.b32.xlu0 %v512, 32
    %v526 = vpop.permute.xlu0 %525
    %527 = vrot.lane.b32.xlu0 %v516, 32
    %v528 = vpop.permute.xlu0 %527
    %529 = vrot.lane.b32.xlu0 %v520, 32
    %v530 = vpop.permute.xlu0 %529
    %531 = vrot.lane.b32.xlu0 %v524, 32
    %v532 = vpop.permute.xlu0 %531
    %vm533 = vcmask 261120
    %v534 = vsel %vm533, %v526, %v528
    %v535 = vsel %vm533, %v530, %v532
    %v538 = vsel %vm306, %v399, %v498
    %v539 = vsel %vm306, %v406, %v500
    %v540 = vsel %vm309, %v538, %v504
    %v541 = vsel %vm309, %v539, %v506
    %v542 = vsel %vm312, %v540, %v534
    %v543 = vsel %vm312, %v541, %v535
    %v544 = vmax.f32 %v439, 0.0
    %v545 = vmax.f32 %v440, 0.0
    %v546 = vand.u32 2147483647, %v439
    %v547 = vand.u32 2147483647, %v440
    %v548 = vsub.f32 0.0, %v546
    %v549 = vsub.f32 0.0, %v547
    %v550 = vmul.f32 %v548, 1.442695
    %v551 = vpow.pop %v550
    %v552 = vmul.f32 %v549, 1.442695
    %v553 = vpow.pop %v552
    %v554 = vadd.f32 %v551, 1.0
    %v555 = vadd.f32 %v553, 1.0
    %v556 = vlog2.pop %v554
    %v557 = vmul.f32 %v556, 0.6931472
    %v558 = vlog2.pop %v555
    %v559 = vmul.f32 %v558, 0.6931472
    %v560 = vadd.f32 %v544, %v557
    %v561 = vadd.f32 %v545, %v559
    %v562 = vsub.f32 0.0, %v439
    %v563 = vsub.f32 0.0, %v440
    %v564 = vmul.f32 %v562, 1.442695
    %v565 = vpow.pop %v564
    %v566 = vmul.f32 %v563, 1.442695
    %v567 = vpow.pop %v566
    %v568 = vadd.f32 %v565, 1.0
    %v569 = vadd.f32 %v567, 1.0
    %v570 = vrcp.pop %v568
    %v571 = vmul.f32 1.0, %v570
    %v572 = vrcp.pop %v569
    %v573 = vmul.f32 1.0, %v572
    %v574 = vadd.f32 %v560, 1.0
    %v575 = vadd.f32 %v561, 1.0
    %v576 = vmul.f32 %v25, %v25
    %v577 = vmul.f32 %v26, %v26
    %v578 = vmul.f32 %v27, %v27
    %v579 = vmul.f32 %v28, %v28
    %v580 = vsel %vm533, %v576, 0.0
    %581 = vadd.xlane.f32.xlu0 %v580
    %v582 = vpop.xlane.xlu0 %581
    %v583 = vsel %vm533, %v577, 0.0
    %584 = vadd.xlane.f32.xlu0 %v583
    %v585 = vpop.xlane.xlu0 %584
    %v586 = vsel %vm533, %v578, 0.0
    %587 = vadd.xlane.f32.xlu0 %v586
    %v588 = vpop.xlane.xlu0 %587
    %v589 = vsel %vm533, %v579, 0.0
    %590 = vadd.xlane.f32.xlu0 %v589
    %v591 = vpop.xlane.xlu0 %590
    %v592 = vadd.f32 %v582, 1e-08
    %v593 = vadd.f32 %v585, 1e-08
    %v594 = vadd.f32 %v588, 1e-08
    %v595 = vadd.f32 %v591, 1e-08
    %v596 = vrsqrt.pop %v592
    %v597 = vmul.f32 %v592, %v596
    %vm598 = vcmp.eq.f32.partialorder %v592, inf
    %v599 = vsel %vm598, %v592, %v597
    %vm600 = vcmp.eq.f32.partialorder %v592, 0.0
    %v601 = vand.u32 %v592, 2147483648
    %v602 = vsel %vm600, %v601, %v599
    %v603 = vrsqrt.pop %v593
    %v604 = vmul.f32 %v593, %v603
    %vm605 = vcmp.eq.f32.partialorder %v593, inf
    %v606 = vsel %vm605, %v593, %v604
    %vm607 = vcmp.eq.f32.partialorder %v593, 0.0
    %v608 = vand.u32 %v593, 2147483648
    %v609 = vsel %vm607, %v608, %v606
    %v610 = vrsqrt.pop %v594
    %v611 = vmul.f32 %v594, %v610
    %vm612 = vcmp.eq.f32.partialorder %v594, inf
    %v613 = vsel %vm612, %v594, %v611
    %vm614 = vcmp.eq.f32.partialorder %v594, 0.0
    %v615 = vand.u32 %v594, 2147483648
    %v616 = vsel %vm614, %v615, %v613
    %v617 = vrsqrt.pop %v595
    %v618 = vmul.f32 %v595, %v617
    %vm619 = vcmp.eq.f32.partialorder %v595, inf
    %v620 = vsel %vm619, %v595, %v618
    %vm621 = vcmp.eq.f32.partialorder %v595, 0.0
    %v622 = vand.u32 %v595, 2147483648
    %v623 = vsel %vm621, %v622, %v620
    %v625 = vsel %vm533, %v313, 0
    %v628 = vsel %vm533, %v25, 0
    %v631 = vsel %vm533, %v26, 0
    %633 = vmatprep.subr.mxu0 0.0
    %634 = vmatpush1.xpose.msra.mxu0 %v628
    %635 = vmatprep.subr.mxu0 0.0
    %636 = vmatpush1.xpose.msra.mxu0 %v631
    %637 = vmatprep.subr.mxu0 0.0
    %638 = vmatpush1.xpose.msra.mxu0 0.0
    %639 = vmatprep.subr.mxu0 0.0
    %640 = vmatpush1.xpose.msra.mxu0 0.0
    %641 = vmatprep.subr.mxu0 0.0
    %642 = vmatpush1.xpose.msra.mxu0 0.0
    %643 = vmatprep.subr.mxu0 0.0
    %644 = vmatpush1.xpose.msra.mxu0 0.0
    %645 = vmatprep.subr.mxu0 0.0
    %646 = vmatpush1.xpose.msra.mxu0 0.0
    %647 = vmatprep.subr.mxu0 0.0
    %648 = vmatpush1.xpose.msra.mxu0 0.0
    %649 = vmatprep.subr.mxu0 0.0
    %650 = vmatpush1.xpose.msra.mxu0 0.0
    %651 = vmatprep.subr.mxu0 0.0
    %652 = vmatpush1.xpose.msra.mxu0 0.0
    %653 = vmatprep.subr.mxu0 0.0
    %654 = vmatpush1.xpose.msra.mxu0 0.0
    %655 = vmatprep.subr.mxu0 0.0
    %656 = vmatpush1.xpose.msra.mxu0 0.0
    %657 = vmatprep.subr.mxu0 0.0
    %658 = vmatpush1.xpose.msra.mxu0 0.0
    %659 = vmatprep.subr.mxu0 0.0
    %660 = vmatpush1.xpose.msra.mxu0 0.0
    %661 = vmatprep.subr.mxu0 0.0
    %662 = vmatpush1.xpose.msra.mxu0 0.0
    %663 = vmatprep.subr.mxu0 0.0
    %664 = vmatpush1.xpose.msra.mxu0 0.0
    %665 = vmatprep.subr.mxu0 0.0
    %666 = vmatpush1.xpose.msra.mxu0 0.0
    %667 = vmatprep.subr.mxu0 0.0
    %668 = vmatpush1.xpose.msra.mxu0 0.0
    %669 = vmatprep.subr.mxu0 0.0
    %670 = vmatpush1.xpose.msra.mxu0 0.0
    %671 = vmatprep.subr.mxu0 0.0
    %672 = vmatpush1.xpose.msra.mxu0 0.0
    %673 = vmatprep.subr.mxu0 0.0
    %674 = vmatpush1.xpose.msra.mxu0 0.0
    %675 = vmatprep.subr.mxu0 0.0
    %676 = vmatpush1.xpose.msra.mxu0 0.0
    %677 = vmatprep.subr.mxu0 0.0
    %678 = vmatpush1.xpose.msra.mxu0 0.0
    %679 = vmatprep.subr.mxu0 0.0
    %680 = vmatpush1.xpose.msra.mxu0 0.0
    %681 = vmatprep.subr.mxu0 0.0
    %682 = vmatpush1.xpose.msra.mxu0 0.0
    %683 = vmatprep.subr.mxu0 0.0
    %684 = vmatpush1.xpose.msra.mxu0 0.0
    %685 = vmatprep.subr.mxu0 0.0
    %686 = vmatpush1.xpose.msra.mxu0 0.0
    %687 = vmatprep.subr.mxu0 0.0
    %688 = vmatpush1.xpose.msra.mxu0 0.0
    %689 = vmatprep.subr.mxu0 0.0
    %690 = vmatpush1.xpose.msra.mxu0 0.0
    %691 = vmatprep.subr.mxu0 0.0
    %692 = vmatpush1.xpose.msra.mxu0 0.0
    %693 = vmatprep.subr.mxu0 0.0
    %694 = vmatpush1.xpose.msra.mxu0 0.0
    %695 = vmatprep.subr.mxu0 0.0
    %696 = vmatpush1.xpose.msra.mxu0 0.0
    %697 = vmatprep.mubr.f32.mxu0 0.0
    %698 = vmatmul.mubr.f32.gmra.mrb[0].mxu0 %v625
    %v699 = vpop.f32.mrb[0].mxu0
    %v700 = vadd.f32 0.0, %v699
    %v701 = vpop.f32.mrb[0].mxu0
    %702 = vdwg.mxu0
    %v704 = vsel %vm533, %v314, 0
    %v707 = vsel %vm533, %v27, 0
    %v710 = vsel %vm533, %v28, 0
    %712 = vmatprep.subr.mxu0 0.0
    %713 = vmatpush1.xpose.msra.mxu0 %v707
    %714 = vmatprep.subr.mxu0 0.0
    %715 = vmatpush1.xpose.msra.mxu0 %v710
    %716 = vmatprep.subr.mxu0 0.0
    %717 = vmatpush1.xpose.msra.mxu0 0.0
    %718 = vmatprep.subr.mxu0 0.0
    %719 = vmatpush1.xpose.msra.mxu0 0.0
    %720 = vmatprep.subr.mxu0 0.0
    %721 = vmatpush1.xpose.msra.mxu0 0.0
    %722 = vmatprep.subr.mxu0 0.0
    %723 = vmatpush1.xpose.msra.mxu0 0.0
    %724 = vmatprep.subr.mxu0 0.0
    %725 = vmatpush1.xpose.msra.mxu0 0.0
    %726 = vmatprep.subr.mxu0 0.0
    %727 = vmatpush1.xpose.msra.mxu0 0.0
    %728 = vmatprep.subr.mxu0 0.0
    %729 = vmatpush1.xpose.msra.mxu0 0.0
    %730 = vmatprep.subr.mxu0 0.0
    %731 = vmatpush1.xpose.msra.mxu0 0.0
    %732 = vmatprep.subr.mxu0 0.0
    %733 = vmatpush1.xpose.msra.mxu0 0.0
    %734 = vmatprep.subr.mxu0 0.0
    %735 = vmatpush1.xpose.msra.mxu0 0.0
    %736 = vmatprep.subr.mxu0 0.0
    %737 = vmatpush1.xpose.msra.mxu0 0.0
    %738 = vmatprep.subr.mxu0 0.0
    %739 = vmatpush1.xpose.msra.mxu0 0.0
    %740 = vmatprep.subr.mxu0 0.0
    %741 = vmatpush1.xpose.msra.mxu0 0.0
    %742 = vmatprep.subr.mxu0 0.0
    %743 = vmatpush1.xpose.msra.mxu0 0.0
    %744 = vmatprep.subr.mxu0 0.0
    %745 = vmatpush1.xpose.msra.mxu0 0.0
    %746 = vmatprep.subr.mxu0 0.0
    %747 = vmatpush1.xpose.msra.mxu0 0.0
    %748 = vmatprep.subr.mxu0 0.0
    %749 = vmatpush1.xpose.msra.mxu0 0.0
    %750 = vmatprep.subr.mxu0 0.0
    %751 = vmatpush1.xpose.msra.mxu0 0.0
    %752 = vmatprep.subr.mxu0 0.0
    %753 = vmatpush1.xpose.msra.mxu0 0.0
    %754 = vmatprep.subr.mxu0 0.0
    %755 = vmatpush1.xpose.msra.mxu0 0.0
    %756 = vmatprep.subr.mxu0 0.0
    %757 = vmatpush1.xpose.msra.mxu0 0.0
    %758 = vmatprep.subr.mxu0 0.0
    %759 = vmatpush1.xpose.msra.mxu0 0.0
    %760 = vmatprep.subr.mxu0 0.0
    %761 = vmatpush1.xpose.msra.mxu0 0.0
    %762 = vmatprep.subr.mxu0 0.0
    %763 = vmatpush1.xpose.msra.mxu0 0.0
    %764 = vmatprep.subr.mxu0 0.0
    %765 = vmatpush1.xpose.msra.mxu0 0.0
    %766 = vmatprep.subr.mxu0 0.0
    %767 = vmatpush1.xpose.msra.mxu0 0.0
    %768 = vmatprep.subr.mxu0 0.0
    %769 = vmatpush1.xpose.msra.mxu0 0.0
    %770 = vmatprep.subr.mxu0 0.0
    %771 = vmatpush1.xpose.msra.mxu0 0.0
    %772 = vmatprep.subr.mxu0 0.0
    %773 = vmatpush1.xpose.msra.mxu0 0.0
    %774 = vmatprep.subr.mxu0 0.0
    %775 = vmatpush1.xpose.msra.mxu0 0.0
    %776 = vmatprep.mubr.f32.mxu0 0.0
    %777 = vmatmul.mubr.f32.gmra.mrb[0].mxu0 %v704
    %v778 = vpop.f32.mrb[0].mxu0
    %v779 = vadd.f32 0.0, %v778
    %v780 = vpop.f32.mrb[0].mxu0
    %781 = vdwg.mxu0
    %v782 = vmul.f32 %v313, %v313
    %v783 = vmul.f32 %v314, %v314
    %vm784 = vcmask 257024
    %v785 = vsel %vm784, %v782, 0.0
    %786 = vadd.xlane.f32.xlu0 %v785
    %v787 = vpop.xlane.xlu0 %786
    %v788 = vsel %vm784, %v783, 0.0
    %789 = vadd.xlane.f32.xlu0 %v788
    %v790 = vpop.xlane.xlu0 %789
    %v791 = vadd.f32 %v787, 1e-08
    %v792 = vadd.f32 %v790, 1e-08
    %v793 = vrsqrt.pop %v791
    %v794 = vmul.f32 %v791, %v793
    %vm795 = vcmp.eq.f32.partialorder %v791, inf
    %v796 = vsel %vm795, %v791, %v794
    %vm797 = vcmp.eq.f32.partialorder %v791, 0.0
    %v798 = vand.u32 %v791, 2147483648
    %v799 = vsel %vm797, %v798, %v796
    %v800 = vrsqrt.pop %v792
    %v801 = vmul.f32 %v792, %v800
    %vm802 = vcmp.eq.f32.partialorder %v792, inf
    %v803 = vsel %vm802, %v792, %v801
    %vm804 = vcmp.eq.f32.partialorder %v792, 0.0
    %v805 = vand.u32 %v792, 2147483648
    %v806 = vsel %vm804, %v805, %v803
    %v811 = vlaneseq
    %v812 = vand.u32 %v811, 127
    %v813 = vlaneseq
    %v814 = vshrl.u32 %v813, 7
    %v815 = vsub.s32 %v812, %v814
    %v816 = vrot.slane %v602, %v815
    %v817 = vadd.s32 %v812, 4294967288
    %v818 = vlaneseq
    %v819 = vshrl.u32 %v818, 7
    %v820 = vsub.s32 %v817, %v819
    %v821 = vrot.slane %v609, %v820
    %vm822 = vcmask 130112
    %v823 = vsel %vm822, %v821, %v816
    %v824 = vlaneseq
    %v825 = vshrl.u32 %v824, 7
    %v826 = vsub.s32 %v812, %v825
    %v827 = vrot.slane %v616, %v826
    %v828 = vlaneseq
    %v829 = vshrl.u32 %v828, 7
    %v830 = vsub.s32 %v817, %v829
    %v831 = vrot.slane %v623, %v830
    %v832 = vsel %vm822, %v831, %v827
    %vm833 = vcmask 1042434
    %v834 = vsel %vm833, %v823, %v823
    %vm835 = vcmask 1043459
    %v836 = vsel %vm835, %v823, %v834
    %v837 = vsel %vm833, %v832, %v832
    %v838 = vsel %vm835, %v832, %v837
    %v841 = vmul.f32 %v799, %v836
    %v842 = vmul.f32 %v806, %v838
    %v843 = vadd.f32 %v841, 1e-08
    %v844 = vadd.f32 %v842, 1e-08
    %v845 = vrcp.pop %v843
    %v846 = vrcp.pop %v844
    %v847 = vmul.f32 %v700, %v845
    %v848 = vmul.f32 %v779, %v846
    %850 = vset.pattern.permute.xlu0 0
    %851 = vperm.xlu0 %850, %v560
    %v852 = vpop.permute.xlu0 %851
    %855 = vset.pattern.permute.xlu0 0
    %856 = vperm.xlu0 %855, %v561
    %v857 = vpop.permute.xlu0 %856
    %v859 = vmul.f32 %v852, %v847
    %v860 = vmul.f32 %v857, %v848
    %vm861 = vcmask 125952
    %v862 = vsel %vm861, %v859, -inf
    %863 = vmax.xlane.f32.xlu0 %v862
    %v864 = vpop.xlane.xlu0 %863
    %v865 = vsel %vm861, %v860, -inf
    %866 = vmax.xlane.f32.xlu0 %v865
    %v867 = vpop.xlane.xlu0 %866
    %v868 = vsub.f32 %v859, %v864
    %v869 = vsub.f32 %v860, %v867
    %v870 = vmul.f32 %v868, 1.442695
    %v871 = vpow.pop %v870
    %v872 = vmul.f32 %v869, 1.442695
    %v873 = vpow.pop %v872
    %v874 = vsel %vm861, %v871, 0.0
    %875 = vadd.xlane.f32.xlu0 %v874
    %v876 = vpop.xlane.xlu0 %875
    %v877 = vsel %vm861, %v873, 0.0
    %878 = vadd.xlane.f32.xlu0 %v877
    %v879 = vpop.xlane.xlu0 %878
    %v880 = vrcp.pop %v876
    %v881 = vrcp.pop %v879
    %v882 = vmul.f32 %v871, %v880
    %v883 = vmul.f32 %v873, %v881
    %885 = vset.pattern.permute.xlu0 1
    %886 = vperm.xlu0 %885, %v571
    %v887 = vpop.permute.xlu0 %886
    %890 = vset.pattern.permute.xlu0 1
    %891 = vperm.xlu0 %890, %v573
    %v892 = vpop.permute.xlu0 %891
    %v894 = vmul.f32 %v887, %v882
    %v895 = vmul.f32 %v892, %v883
    %v896 = vsub.f32 1.0, %v571
    %v897 = vsub.f32 1.0, %v573
    %899 = vset.pattern.permute.xlu0 1
    %900 = vperm.xlu0 %899, %v896
    %v901 = vpop.permute.xlu0 %900
    %904 = vset.pattern.permute.xlu0 1
    %905 = vperm.xlu0 %904, %v897
    %v906 = vpop.permute.xlu0 %905
    %v908 = vmul.f32 %v901, %v29
    %v909 = vmul.f32 %v906, %v30
    %v910 = vadd.f32 %v894, %v908
    %v911 = vadd.f32 %v895, %v909
    %914 = vrot.lane.b32.xlu0 %v910, 127
    %v915 = vpop.permute.xlu0 %914
    %916 = vrot.lane.b32.xlu0 %v911, 127
    %v917 = vpop.permute.xlu0 %916
    %920 = vrot.lane.b32.xlu0 %v910, 15
    %v921 = vpop.permute.xlu0 %920
    %922 = vrot.lane.b32.xlu0 %v911, 15
    %v923 = vpop.permute.xlu0 %922
    %vm926 = vcmask 121856
    %v927 = vsel %vm926, %v915, %v921
    %v928 = vsel %vm926, %v917, %v923
    %930 = vset.pattern.permute.xlu0 12
    %931 = vperm.xlu0 %930, %v471
    %v932 = vpop.permute.xlu0 %931
    %935 = vset.pattern.permute.xlu0 12
    %936 = vperm.xlu0 %935, %v472
    %v937 = vpop.permute.xlu0 %936
    %v939 = vmul.f32 %v932, %v927
    %v940 = vmul.f32 %v937, %v928
    %v941 = vadd.f32 %v939, 0.0
    %v942 = vadd.f32 %v940, 0.0
    %943 = vset.pattern.permute.xlu0 13
    %944 = vperm.xlu0 %943, %v471
    %v945 = vpop.permute.xlu0 %944
    %947 = vset.pattern.permute.xlu0 13
    %948 = vperm.xlu0 %947, %v472
    %v949 = vpop.permute.xlu0 %948
    %v951 = vmul.f32 %v945, %v910
    %v952 = vmul.f32 %v949, %v911
    %v953 = vadd.f32 %v941, %v951
    %v954 = vadd.f32 %v942, %v952
    %955 = vrot.lane.b32.xlu0 %v910, 113
    %v956 = vpop.permute.xlu0 %955
    %957 = vrot.lane.b32.xlu0 %v911, 113
    %v958 = vpop.permute.xlu0 %957
    %961 = vrot.lane.b32.xlu0 %v910, 1
    %v962 = vpop.permute.xlu0 %961
    %963 = vrot.lane.b32.xlu0 %v911, 1
    %v964 = vpop.permute.xlu0 %963
    %vm967 = vcmask 7168
    %v968 = vsel %vm967, %v956, %v962
    %v969 = vsel %vm967, %v958, %v964
    %970 = vset.pattern.permute.xlu0 14
    %971 = vperm.xlu0 %970, %v471
    %v972 = vpop.permute.xlu0 %971
    %974 = vset.pattern.permute.xlu0 14
    %975 = vperm.xlu0 %974, %v472
    %v976 = vpop.permute.xlu0 %975
    %v978 = vmul.f32 %v972, %v968
    %v979 = vmul.f32 %v976, %v969
    %v980 = vadd.f32 %v953, %v978
    %v981 = vadd.f32 %v954, %v979
    %v982 = vadd.f32 %v980, 1e-12
    %v983 = vadd.f32 %v981, 1e-12
    %v984 = vlog2.pop %v982
    %v985 = vmul.f32 %v984, 0.6931472
    %v986 = vlog2.pop %v983
    %v987 = vmul.f32 %v986, 0.6931472
    %989 = vset.pattern.permute.xlu0 2
    %990 = vperm.xlu0 %989, %v574
    %v991 = vpop.permute.xlu0 %990
    %994 = vset.pattern.permute.xlu0 2
    %995 = vperm.xlu0 %994, %v575
    %v996 = vpop.permute.xlu0 %995
    %v998 = vmul.f32 %v991, %v985
    %v999 = vmul.f32 %v996, %v987
    %v1000 = vmul.f32 %v998, 1.442695
    %v1001 = vpow.pop %v1000
    %v1002 = vmul.f32 %v999, 1.442695
    %v1003 = vpow.pop %v1002
    %v1004 = vsel %vm861, %v1001, 0.0
    %1005 = vadd.xlane.f32.xlu0 %v1004
    %v1006 = vpop.xlane.xlu0 %1005
    %v1007 = vsel %vm861, %v1003, 0.0
    %1008 = vadd.xlane.f32.xlu0 %v1007
    %v1009 = vpop.xlane.xlu0 %1008
    %v1010 = vrcp.pop %v1006
    %v1011 = vrcp.pop %v1009
    %v1012 = vmul.f32 %v1001, %v1010
    %v1013 = vmul.f32 %v1003, %v1011
    %v1017 = vunpack.c.l.s4 1966171168
    %v1018 = vunpack.c.0.s8 %v1017
    %v1019 = vlaneseq
    %v1020 = vshrl.u32 %v1019, 7
    %v1021 = vsub.s32 %v1018, %v1020
    %v1022 = vrot.slane %v381, %v1021
    %v1023 = vcombine.high %v1022, %v1022
    %v1025 = vunpack.c.l.s4 1966171168
    %v1026 = vunpack.c.0.s8 %v1025
    %v1027 = vlaneseq
    %v1028 = vshrl.u32 %v1027, 7
    %v1029 = vsub.s32 %v1026, %v1028
    %v1030 = vrot.slane %v1022, %v1029
    %v1032 = vunpack.c.l.s4 1966171168
    %v1033 = vunpack.c.0.s8 %v1032
    %v1034 = vlaneseq
    %v1035 = vshrl.u32 %v1034, 7
    %v1036 = vsub.s32 %v1033, %v1035
    %v1037 = vrot.slane %v1023, %v1036
    %v1038 = vcombine.high %v1030, %v1030
    %v1039 = vcombine.high %v1037, %v1037
    %v1041 = vunpack.c.l.s4 1966171168
    %v1042 = vunpack.c.0.s8 %v1041
    %v1043 = vlaneseq
    %v1044 = vshrl.u32 %v1043, 7
    %v1045 = vsub.s32 %v1042, %v1044
    %v1046 = vrot.slane %v383, %v1045
    %v1047 = vcombine.high %v1046, %v1046
    %v1049 = vunpack.c.l.s4 1966171168
    %v1050 = vunpack.c.0.s8 %v1049
    %v1051 = vlaneseq
    %v1052 = vshrl.u32 %v1051, 7
    %v1053 = vsub.s32 %v1050, %v1052
    %v1054 = vrot.slane %v1046, %v1053
    %v1056 = vunpack.c.l.s4 1966171168
    %v1057 = vunpack.c.0.s8 %v1056
    %v1058 = vlaneseq
    %v1059 = vshrl.u32 %v1058, 7
    %v1060 = vsub.s32 %v1057, %v1059
    %v1061 = vrot.slane %v1047, %v1060
    %v1062 = vcombine.high %v1054, %v1054
    %v1063 = vcombine.high %v1061, %v1061
    %v1064 = vlaneseq
    %v1065 = vshrl.u32 %v1064, 7
    %v1066 = vsub.s32 0, %v1065
    %v1067 = vrot.slane %v1012, %v1066
    %1069 = vbcast.lane.b32.xlu0 %v1067, 256
    %v1070 = vpop.permute.xlu0 %1069
    %s1072 = sor.u32 256, 8
    %1073 = vbcast.lane.b32.xlu0 %v1067, %s1072
    %v1074 = vpop.permute.xlu0 %1073
    %v1075 = vlaneseq
    %v1076 = vshrl.u32 %v1075, 7
    %v1077 = vsub.s32 1, %v1076
    %v1078 = vrot.slane %v1012, %v1077
    %1080 = vbcast.lane.b32.xlu0 %v1078, 256
    %v1081 = vpop.permute.xlu0 %1080
    %s1083 = sor.u32 256, 8
    %1084 = vbcast.lane.b32.xlu0 %v1078, %s1083
    %v1085 = vpop.permute.xlu0 %1084
    %v1086 = vlaneseq
    %v1087 = vshrl.u32 %v1086, 7
    %v1088 = vsub.s32 2, %v1087
    %v1089 = vrot.slane %v1012, %v1088
    %1091 = vbcast.lane.b32.xlu0 %v1089, 256
    %v1092 = vpop.permute.xlu0 %1091
    %s1094 = sor.u32 256, 8
    %1095 = vbcast.lane.b32.xlu0 %v1089, %s1094
    %v1096 = vpop.permute.xlu0 %1095
    %v1097 = vlaneseq
    %v1098 = vshrl.u32 %v1097, 7
    %v1099 = vsub.s32 3, %v1098
    %v1100 = vrot.slane %v1012, %v1099
    %1102 = vbcast.lane.b32.xlu0 %v1100, 256
    %v1103 = vpop.permute.xlu0 %1102
    %s1105 = sor.u32 256, 8
    %1106 = vbcast.lane.b32.xlu0 %v1100, %s1105
    %v1107 = vpop.permute.xlu0 %1106
    %v1108 = vlaneseq
    %v1109 = vshrl.u32 %v1108, 7
    %v1110 = vsub.s32 0, %v1109
    %v1111 = vrot.slane %v1013, %v1110
    %1113 = vbcast.lane.b32.xlu0 %v1111, 256
    %v1114 = vpop.permute.xlu0 %1113
    %s1116 = sor.u32 256, 8
    %1117 = vbcast.lane.b32.xlu0 %v1111, %s1116
    %v1118 = vpop.permute.xlu0 %1117
    %v1119 = vlaneseq
    %v1120 = vshrl.u32 %v1119, 7
    %v1121 = vsub.s32 1, %v1120
    %v1122 = vrot.slane %v1013, %v1121
    %1124 = vbcast.lane.b32.xlu0 %v1122, 256
    %v1125 = vpop.permute.xlu0 %1124
    %s1127 = sor.u32 256, 8
    %1128 = vbcast.lane.b32.xlu0 %v1122, %s1127
    %v1129 = vpop.permute.xlu0 %1128
    %v1130 = vlaneseq
    %v1131 = vshrl.u32 %v1130, 7
    %v1132 = vsub.s32 2, %v1131
    %v1133 = vrot.slane %v1013, %v1132
    %1135 = vbcast.lane.b32.xlu0 %v1133, 256
    %v1136 = vpop.permute.xlu0 %1135
    %s1138 = sor.u32 256, 8
    %1139 = vbcast.lane.b32.xlu0 %v1133, %s1138
    %v1140 = vpop.permute.xlu0 %1139
    %v1141 = vlaneseq
    %v1142 = vshrl.u32 %v1141, 7
    %v1143 = vsub.s32 3, %v1142
    %v1144 = vrot.slane %v1013, %v1143
    %1146 = vbcast.lane.b32.xlu0 %v1144, 256
    %v1147 = vpop.permute.xlu0 %1146
    %s1149 = sor.u32 256, 8
    %1150 = vbcast.lane.b32.xlu0 %v1144, %s1149
    %v1151 = vpop.permute.xlu0 %1150
    %v1152 = vlaneseq
    %v1153 = vshrl.u32 %v1152, 7
    %v1154 = vsub.s32 0, %v1153
    %v1155 = vrot.slane %v1030, %v1154
    %v1156 = vlaneseq
    %v1157 = vshrl.u32 %v1156, 7
    %v1158 = vsub.s32 0, %v1157
    %v1159 = vrot.slane %v1037, %v1158
    %v1160 = vlaneseq
    %v1161 = vshrl.u32 %v1160, 7
    %v1162 = vsub.s32 0, %v1161
    %v1163 = vrot.slane %v1038, %v1162
    %v1164 = vlaneseq
    %v1165 = vshrl.u32 %v1164, 7
    %v1166 = vsub.s32 0, %v1165
    %v1167 = vrot.slane %v1039, %v1166
    %v1168 = vlaneseq
    %v1169 = vshrl.u32 %v1168, 7
    %v1170 = vsub.s32 0, %v1169
    %v1171 = vrot.slane %v1054, %v1170
    %v1172 = vlaneseq
    %v1173 = vshrl.u32 %v1172, 7
    %v1174 = vsub.s32 0, %v1173
    %v1175 = vrot.slane %v1061, %v1174
    %v1176 = vlaneseq
    %v1177 = vshrl.u32 %v1176, 7
    %v1178 = vsub.s32 0, %v1177
    %v1179 = vrot.slane %v1062, %v1178
    %v1180 = vlaneseq
    %v1181 = vshrl.u32 %v1180, 7
    %v1182 = vsub.s32 0, %v1181
    %v1183 = vrot.slane %v1063, %v1182
    %v1192 = vmul.f32 %v1155, %v1070
    %v1193 = vmul.f32 %v1155, %v1074
    %v1194 = vmul.f32 %v1159, %v1081
    %v1195 = vmul.f32 %v1159, %v1085
    %v1196 = vmul.f32 %v1163, %v1092
    %v1197 = vmul.f32 %v1163, %v1096
    %v1198 = vmul.f32 %v1167, %v1103
    %v1199 = vmul.f32 %v1167, %v1107
    %v1200 = vmul.f32 %v1171, %v1114
    %v1201 = vmul.f32 %v1171, %v1118
    %v1202 = vmul.f32 %v1175, %v1125
    %v1203 = vmul.f32 %v1175, %v1129
    %v1204 = vmul.f32 %v1179, %v1136
    %v1205 = vmul.f32 %v1179, %v1140
    %v1206 = vmul.f32 %v1183, %v1147
    %v1207 = vmul.f32 %v1183, %v1151
    %v1208 = vsub.f32 1.0, %v1192
    %v1209 = vsub.f32 1.0, %v1193
    %v1210 = vsub.f32 1.0, %v1194
    %v1211 = vsub.f32 1.0, %v1195
    %v1212 = vsub.f32 1.0, %v1196
    %v1213 = vsub.f32 1.0, %v1197
    %v1214 = vsub.f32 1.0, %v1198
    %v1215 = vsub.f32 1.0, %v1199
    %v1216 = vsub.f32 1.0, %v1200
    %v1217 = vsub.f32 1.0, %v1201
    %v1218 = vsub.f32 1.0, %v1202
    %v1219 = vsub.f32 1.0, %v1203
    %v1220 = vsub.f32 1.0, %v1204
    %v1221 = vsub.f32 1.0, %v1205
    %v1222 = vsub.f32 1.0, %v1206
    %v1223 = vsub.f32 1.0, %v1207
    %v1227 = vunpack.c.l.s4 1966171168
    %v1228 = vunpack.c.0.s8 %v1227
    %v1229 = vlaneseq
    %v1230 = vshrl.u32 %v1229, 7
    %v1231 = vsub.s32 %v1228, %v1230
    %v1232 = vrot.slane %v542, %v1231
    %v1233 = vcombine.high %v1232, %v1232
    %v1235 = vunpack.c.l.s4 1966171168
    %v1236 = vunpack.c.0.s8 %v1235
    %v1237 = vlaneseq
    %v1238 = vshrl.u32 %v1237, 7
    %v1239 = vsub.s32 %v1236, %v1238
    %v1240 = vrot.slane %v1232, %v1239
    %v1242 = vunpack.c.l.s4 1966171168
    %v1243 = vunpack.c.0.s8 %v1242
    %v1244 = vlaneseq
    %v1245 = vshrl.u32 %v1244, 7
    %v1246 = vsub.s32 %v1243, %v1245
    %v1247 = vrot.slane %v1233, %v1246
    %v1248 = vcombine.high %v1240, %v1240
    %v1249 = vcombine.high %v1247, %v1247
    %v1251 = vunpack.c.l.s4 1966171168
    %v1252 = vunpack.c.0.s8 %v1251
    %v1253 = vlaneseq
    %v1254 = vshrl.u32 %v1253, 7
    %v1255 = vsub.s32 %v1252, %v1254
    %v1256 = vrot.slane %v543, %v1255
    %v1257 = vcombine.high %v1256, %v1256
    %v1259 = vunpack.c.l.s4 1966171168
    %v1260 = vunpack.c.0.s8 %v1259
    %v1261 = vlaneseq
    %v1262 = vshrl.u32 %v1261, 7
    %v1263 = vsub.s32 %v1260, %v1262
    %v1264 = vrot.slane %v1256, %v1263
    %v1266 = vunpack.c.l.s4 1966171168
    %v1267 = vunpack.c.0.s8 %v1266
    %v1268 = vlaneseq
    %v1269 = vshrl.u32 %v1268, 7
    %v1270 = vsub.s32 %v1267, %v1269
    %v1271 = vrot.slane %v1257, %v1270
    %v1272 = vcombine.high %v1264, %v1264
    %v1273 = vcombine.high %v1271, %v1271
    %v1274 = vlaneseq
    %v1275 = vshrl.u32 %v1274, 7
    %v1276 = vsub.s32 0, %v1275
    %v1277 = vrot.slane %v1240, %v1276
    %v1278 = vlaneseq
    %v1279 = vshrl.u32 %v1278, 7
    %v1280 = vsub.s32 0, %v1279
    %v1281 = vrot.slane %v1247, %v1280
    %v1282 = vlaneseq
    %v1283 = vshrl.u32 %v1282, 7
    %v1284 = vsub.s32 0, %v1283
    %v1285 = vrot.slane %v1248, %v1284
    %v1286 = vlaneseq
    %v1287 = vshrl.u32 %v1286, 7
    %v1288 = vsub.s32 0, %v1287
    %v1289 = vrot.slane %v1249, %v1288
    %v1290 = vlaneseq
    %v1291 = vshrl.u32 %v1290, 7
    %v1292 = vsub.s32 0, %v1291
    %v1293 = vrot.slane %v1264, %v1292
    %v1294 = vlaneseq
    %v1295 = vshrl.u32 %v1294, 7
    %v1296 = vsub.s32 0, %v1295
    %v1297 = vrot.slane %v1271, %v1296
    %v1298 = vlaneseq
    %v1299 = vshrl.u32 %v1298, 7
    %v1300 = vsub.s32 0, %v1299
    %v1301 = vrot.slane %v1272, %v1300
    %v1302 = vlaneseq
    %v1303 = vshrl.u32 %v1302, 7
    %v1304 = vsub.s32 0, %v1303
    %v1305 = vrot.slane %v1273, %v1304
    %v1314 = vmul.f32 %v1277, %v1070
    %v1315 = vmul.f32 %v1277, %v1074
    %v1316 = vmul.f32 %v1281, %v1081
    %v1317 = vmul.f32 %v1281, %v1085
    %v1318 = vmul.f32 %v1285, %v1092
    %v1319 = vmul.f32 %v1285, %v1096
    %v1320 = vmul.f32 %v1289, %v1103
    %v1321 = vmul.f32 %v1289, %v1107
    %v1322 = vmul.f32 %v1293, %v1114
    %v1323 = vmul.f32 %v1293, %v1118
    %v1324 = vmul.f32 %v1297, %v1125
    %v1325 = vmul.f32 %v1297, %v1129
    %v1326 = vmul.f32 %v1301, %v1136
    %v1327 = vmul.f32 %v1301, %v1140
    %v1328 = vmul.f32 %v1305, %v1147
    %v1329 = vmul.f32 %v1305, %v1151
    %v1330 = vmul.f32 %v25, %v1208
    %v1331 = vmul.f32 %v26, %v1209
    %v1332 = vmul.f32 %v27, %v1216
    %v1333 = vmul.f32 %v28, %v1217
    %v1334 = vmul.f32 %v25, %v1210
    %v1335 = vmul.f32 %v26, %v1211
    %v1336 = vmul.f32 %v27, %v1218
    %v1337 = vmul.f32 %v28, %v1219
    %v1338 = vmul.f32 %v1330, %v1334
    %v1339 = vmul.f32 %v1331, %v1335
    %v1340 = vmul.f32 %v1332, %v1336
    %v1341 = vmul.f32 %v1333, %v1337
    %v1342 = vadd.f32 %v1314, %v1316
    %v1343 = vadd.f32 %v1315, %v1317
    %v1344 = vadd.f32 %v1322, %v1324
    %v1345 = vadd.f32 %v1323, %v1325
    %v1346 = vmul.f32 %v25, %v1212
    %v1347 = vmul.f32 %v26, %v1213
    %v1348 = vmul.f32 %v27, %v1220
    %v1349 = vmul.f32 %v28, %v1221
    %v1350 = vmul.f32 %v1338, %v1346
    %v1351 = vmul.f32 %v1339, %v1347
    %v1352 = vmul.f32 %v1340, %v1348
    %v1353 = vmul.f32 %v1341, %v1349
    %v1354 = vadd.f32 %v1342, %v1318
    %v1355 = vadd.f32 %v1343, %v1319
    %v1356 = vadd.f32 %v1344, %v1326
    %v1357 = vadd.f32 %v1345, %v1327
    %v1358 = vmul.f32 %v25, %v1214
    %v1359 = vmul.f32 %v26, %v1215
    %v1360 = vmul.f32 %v27, %v1222
    %v1361 = vmul.f32 %v28, %v1223
    %v1362 = vmul.f32 %v1350, %v1358
    %v1363 = vmul.f32 %v1351, %v1359
    %v1364 = vmul.f32 %v1352, %v1360
    %v1365 = vmul.f32 %v1353, %v1361
    %v1366 = vadd.f32 %v1354, %v1320
    %v1367 = vadd.f32 %v1355, %v1321
    %v1368 = vadd.f32 %v1356, %v1328
    %v1369 = vadd.f32 %v1357, %v1329
    %1370 = vst.msk [vmem:[#allocation2] sm:$0xf] %vm861, %v1012
    %1371 = vst.msk [vmem:[#allocation2 + $0x4] sm:$0xf] %vm861, %v1013
    %1376 = vrot.lane.b32.xlu0 %v1366, 104
    %v1377 = vpop.permute.xlu0 %1376
    %1378 = vrot.lane.b32.xlu0 %v1367, 104
    %v1379 = vpop.permute.xlu0 %1378
    %1380 = vrot.lane.b32.xlu0 %v1368, 104
    %v1381 = vpop.permute.xlu0 %1380
    %1382 = vrot.lane.b32.xlu0 %v1369, 104
    %v1383 = vpop.permute.xlu0 %1382
    %v1388 = vadd.f32 %v1362, %v1377
    %v1389 = vadd.f32 %v1363, %v1379
    %v1390 = vadd.f32 %v1364, %v1381
    %v1391 = vadd.f32 %v1365, %v1383
    %1392 = vst.msk [vmem:[#allocation4] sm:$0xff] %vm533, %v1388
    %1393 = vst.msk [vmem:[#allocation4 + $0x8] sm:$0xff] %vm533, %v1389
    %1394 = vst.msk [vmem:[#allocation4 + $0x10] sm:$0xff] %vm533, %v1390
    %1395 = vst.msk [vmem:[#allocation4 + $0x18] sm:$0xff] %vm533, %v1391
    // Predicated region
    $region22: #{writer_forward.1} parent=1 // pred_check
      _
    $region23: #{writer_forward.1} parent=1 // pred_check_branch
      %1397 = sbr.rel (0) target = $region25
    $region24: #{writer_forward.1} parent=1 // pred_region
      %s1399 = ssub.s32 128, 128
      %1400 = vsyncadd [#allocation3], %s1399
      %s1401 = sshll.u32 [#allocation2], 4
      %s1402 = int_to_ptr.vmem [resolvable:$true] %s1401
      %1407 = dma.vmem_to_hbm [thread:$0]  %s1402, 128, %s5, [#allocation3], 64, 64, 4
    $region25: #{writer_forward.1} parent=1 // pred_fallthru
      _
    // Predicated region
    $region26: #{writer_forward.1} parent=1 // pred_check
      _
    $region27: #{writer_forward.1} parent=1 // pred_check_branch
      %1409 = sbr.rel (0) target = $region29
    $region28: #{writer_forward.1} parent=1 // pred_region
      %s1411 = ssub.s32 512, 512
      %1412 = vsyncadd [#allocation5], %s1411
      %s1413 = sshll.u32 [#allocation4], 4
      %s1414 = int_to_ptr.vmem [resolvable:$true] %s1413
      %1419 = dma.vmem_to_hbm [thread:$0]  %s1414, 512, %s6, [#allocation5], 128, 128, 8
    $region29: #{writer_forward.1} parent=1 // pred_fallthru
      _
    // Predicated region
    $region30: #{writer_forward.1} parent=1 // pred_check
      _
    $region31: #{writer_forward.1} parent=1 // pred_check_branch
      %1421 = sbr.rel (0) target = $region33
    $region32: #{writer_forward.1} parent=1 // pred_region
      %1422 = dma.done [#allocation3], 128
    $region33: #{writer_forward.1} parent=1 // pred_fallthru
      _
    // Predicated region
    $region34: #{writer_forward.1} parent=1 // pred_check
      _
    $region35: #{writer_forward.1} parent=1 // pred_check_branch
      %1424 = sbr.rel (0) target = $region37
    $region36: #{writer_forward.1} parent=1 // pred_region
      %1425 = dma.done [#allocation5], 512
    $region37: #{writer_forward.1} parent=1 // pred_fallthru
      _
    %1426 = vsyncpa [#allocation3], 1
    %1427 = vsyncpa [#allocation5], 1

</llo_original>
